<compile_context>
chip_gen: v5e
topology: v5e:2x2
jax: 0.10.0
libtpu: 0.0.40
codegen_flags: <defaults>
</compile_context>

<pallas_src>
import math

import numpy as np
import jax
import jax.numpy as jnp
from jax.experimental import pallas as pl
from jax.experimental.pallas import tpu as pltpu

# ----------------------------- configuration (Desc + Net) -----------------------------
HISTORY_DAYS = 8          # sequence length of the input (reduced to 1 by the blocks)
C_IN = 4                  # in_channels
N_GATED = 2               # desc.blocks     (gated blocks per _Blocks)
K = 3                     # desc.kernels
C_INNER = 8               # desc.channels
C_OUT = 8                 # desc.out_channels
N_BLOCKS = int(math.log2(HISTORY_DAYS - 1)) + 1   # number of _Blocks in Net
B = 2                     # batch
L0 = HISTORY_DAYS
LANE_TILE = 128           # batch tile on the lane axis (use 256 on v6e/v7x for big batches)


def _block_lengths():
    lens, L = [], L0
    for _ in range(N_BLOCKS):
        lens.append(L)
        L = (L - 1) // 2 + 1
    return lens, L


BLOCK_LENS, L_FINAL = _block_lengths()     # [8, 4, 2], final length 1


# --------------------------------------- kernel ---------------------------------------
def net_kernel(x_ref, w_ref, b_ref, out_ref):
    """x: (C_IN*L0, LANE_TILE) batch-on-lanes; w/b: packed constant slabs; out: (C_OUT, LANE_TILE)."""
    f32 = jnp.float32
    X = x_ref[...]                                   # (C_IN*L0, LANE_TILE), f32
    skips = jnp.zeros((C_OUT, LANE_TILE), f32)
    final = None

    wo = 0   # row offset into the weight slab (static, compile-time)
    bo = 0   # row offset into the bias slab   (static, compile-time)
    for nb in range(N_BLOCKS):
        L = BLOCK_LENS[nb]
        CL = C_INNER * L                             # sublane-aligned split point
        XL = C_IN * L
        Lh = (L - 1) // 2 + 1

        # ---- desc.blocks gated residual blocks (length preserved) ----
        for _ in range(N_GATED):
            a_sg = w_ref[wo:wo + 2 * CL, :XL]
            b_sg = b_ref[bo:bo + 2 * CL, :]
            wo += 2 * CL
            bo += 2 * CL
            # fused (signal | gate): all K causal taps folded into one matrix
            sg = jnp.dot(a_sg, X, preferred_element_type=f32) + b_sg
            sig = jnp.maximum(sg[:CL], 0.0)          # relu
            gat = jax.nn.sigmoid(sg[CL:])            # sigmoid on the EUP path
            gs = sig * gat                           # let sg/sig/gat die before a_out loads

            a_out = w_ref[wo:wo + XL, :CL]
            b_out = b_ref[bo:bo + XL, :]
            wo += XL
            bo += XL
            X = X + jnp.dot(a_out, gs, preferred_element_type=f32) + b_out

        # ---- fused tail: [skip ; downsample] in ONE matmul.  For the last block the
        #      final 1x1 conv is pre-folded into the downsample rows. ----
        tail_out = C_OUT if nb == N_BLOCKS - 1 else C_IN * Lh
        rows = C_OUT + tail_out
        a_t = w_ref[wo:wo + rows, :XL]
        b_t = b_ref[bo:bo + rows, :]
        wo += rows
        bo += rows
        t = jnp.dot(a_t, X, preferred_element_type=f32) + b_t
        skips = skips + t[:C_OUT]
        if nb == N_BLOCKS - 1:
            final = t[C_OUT:]
        else:
            X = t[C_OUT:]

    out_ref[...] = jnp.maximum(skips + final, 0.0).astype(out_ref.dtype)


# --------------------- host-side fusion of conv weights into slabs ---------------------
def _shift_mat_np(L, d):
    """M[t, s] = 1 iff s == t - d   (causal shift by d with zero fill)."""
    m = np.zeros((L, L), np.float32)
    for t in range(L):
        s = t - d
        if 0 <= s < L:
            m[t, s] = 1.0
    return m


def _even_odd_mats_np(L):
    """P0[t,s]=[s==2t-1], P1[t,s]=[s==2t] for the stride-2, left-pad-1, kernel-2 conv."""
    Lh = (L - 1) // 2 + 1
    p0 = np.zeros((Lh, L), np.float32)
    p1 = np.zeros((Lh, L), np.float32)
    for t in range(Lh):
        if 0 <= 2 * t - 1 < L:
            p0[t, 2 * t - 1] = 1.0
        p1[t, 2 * t] = 1.0
    return p0, p1


def build_packed_params(params):
    """Fold conv taps / shifts / selections into dense matrices (numpy, done ONCE) and pack
    them into two contiguous 8-row-aligned slabs: weights (R, 64) and lane-broadcast biases
    (R, LANE_TILE).  Row order matches the kernel's static consumption order exactly."""
    ps = [np.asarray(p, np.float32) for p in params]
    WS, BS, WG, BG, WO, BO, WSK, BSK, WD, BD, WF, BF = ps

    w_mats, b_vecs = [], []
    L = L0
    for nb in range(N_BLOCKS):
        eye_L = np.eye(L, dtype=np.float32)
        ones_L = np.ones((L, 1), np.float32)
        shifts = [_shift_mat_np(L, K - 1 - j) for j in range(K)]
        for ng in range(N_GATED):
            g = nb * N_GATED + ng
            a_sig = sum(np.kron(WS[g * K + j], shifts[j]) for j in range(K))
            a_gat = sum(np.kron(WG[g * K + j], shifts[j]) for j in range(K))
            a_sg = np.concatenate([a_sig, a_gat], axis=0)                 # (2*C_INNER*L, C_IN*L)
            b_sg = np.concatenate([np.kron(BS[g], ones_L),
                                   np.kron(BG[g], ones_L)], axis=0)       # (2*C_INNER*L, 1)
            a_out = np.kron(WO[g], eye_L)                                 # (C_IN*L, C_INNER*L)
            b_out = np.kron(BO[g], ones_L)                                # (C_IN*L, 1)
            w_mats += [a_sg, a_out]
            b_vecs += [b_sg, b_out]

        # skip (last-timestep 1x1 conv) stacked with the stride-2 downsample
        e_last = np.zeros((1, L), np.float32)
        e_last[0, L - 1] = 1.0
        sk = np.kron(WSK[nb], e_last)                                     # (C_OUT, C_IN*L)
        p0, p1 = _even_odd_mats_np(L)
        Lh = (L - 1) // 2 + 1
        d = np.kron(WD[2 * nb], p0) + np.kron(WD[2 * nb + 1], p1)         # (C_IN*Lh, C_IN*L)
        b_d = np.kron(BD[nb], np.ones((Lh, 1), np.float32))               # (C_IN*Lh, 1)
        if nb == N_BLOCKS - 1:
            # fold final 1x1 conv WF into the last downsample: WF@(d X + b_d) + BF
            d = WF @ d                                                    # (C_OUT, C_IN*L)
            b_d = WF @ b_d + BF                                           # (C_OUT, 1)
        w_mats += [np.concatenate([sk, d], axis=0)]
        b_vecs += [np.concatenate([BSK[nb], b_d], axis=0)]
        L = Lh

    w_cols = max(m.shape[1] for m in w_mats)                              # 64
    w_slab = np.concatenate(
        [np.pad(m, ((0, 0), (0, w_cols - m.shape[1]))) for m in w_mats], axis=0)
    b_slab = np.concatenate(
        [np.broadcast_to(v, (v.shape[0], LANE_TILE)) for v in b_vecs], axis=0)
    assert w_slab.shape[0] % 8 == 0 and b_slab.shape[0] % 8 == 0
    return jnp.asarray(w_slab, jnp.float32), jnp.asarray(b_slab, jnp.float32)


# -------------------------------------- wrapper ---------------------------------------
@jax.jit
def _net_forward_packed(x, w_slab, b_slab):
    Bn = x.shape[0]
    b_pad = ((Bn + LANE_TILE - 1) // LANE_TILE) * LANE_TILE
    n_tiles = b_pad // LANE_TILE

    # (B, C_IN, L0) -> (C_IN*L0, B) : batch on the lane axis, zero-padded to a 128 multiple.
    x_flat = x.reshape(Bn, C_IN * L0).T.astype(jnp.float32)
    x_flat = jnp.pad(x_flat, ((0, 0), (0, b_pad - Bn)))

    out_flat = pl.pallas_call(
        net_kernel,
        out_shape=jax.ShapeDtypeStruct((C_OUT, b_pad), jnp.float32),
        grid=(n_tiles,),
        in_specs=[
            pl.BlockSpec((C_IN * L0, LANE_TILE), lambda b: (0, b)),
            pl.BlockSpec(w_slab.shape, lambda b: (0, 0)),      # single packed weight slab
            pl.BlockSpec(b_slab.shape, lambda b: (0, 0)),      # single packed bias slab
        ],
        out_specs=pl.BlockSpec((C_OUT, LANE_TILE), lambda b: (0, b)),
        compiler_params=pltpu.CompilerParams(dimension_semantics=("parallel",)),
    )(x_flat, w_slab, b_slab)

    # lane-dense (C_OUT, b_pad) -> PyTorch layout (B, C_OUT, 1); padded lanes are dropped.
    return out_flat[:, :Bn].T[:, :, None]


def make_net_forward(params):
    """Fuse + pack parameters once (host-side numpy), return a jitted forward fn."""
    w_slab, b_slab = build_packed_params(params)
    return lambda x: _net_forward_packed(x, w_slab, b_slab)


# ------------------------- deterministic parameter initialization ---------------------
def init_params(key):
    ks = jax.random.split(key, 12)

    def rnd(k, shape, scale=0.1):
        return scale * jax.random.normal(k, shape, jnp.float32)

    # weights are stored with the conv tap index flattened into the leading axis:
    # WS[(nb*N_GATED + ng)*K + j] == torch signal_conv.weight[:, :, j]  of block (nb, ng)
    WS = rnd(ks[0], (N_BLOCKS * N_GATED * K, C_INNER, C_IN))
    BS = rnd(ks[1], (N_BLOCKS * N_GATED, C_INNER, 1), 0.05)
    WG = rnd(ks[2], (N_BLOCKS * N_GATED * K, C_INNER, C_IN))
    BG = rnd(ks[3], (N_BLOCKS * N_GATED, C_INNER, 1), 0.05)
    WO = rnd(ks[4], (N_BLOCKS * N_GATED, C_IN, C_INNER))
    BO = rnd(ks[5], (N_BLOCKS * N_GATED, C_IN, 1), 0.05)
    WSK = rnd(ks[6], (N_BLOCKS, C_OUT, C_IN))
    BSK = rnd(ks[7], (N_BLOCKS, C_OUT, 1), 0.05)
    WD = rnd(ks[8], (N_BLOCKS * 2, C_IN, C_IN))
    BD = rnd(ks[9], (N_BLOCKS, C_IN, 1), 0.05)
    WF = rnd(ks[10], (C_OUT, C_IN))
    BF = rnd(ks[11], (C_OUT, 1), 0.05)
    return (WS, BS, WG, BG, WO, BO, WSK, BSK, WD, BD, WF, BF)


# -------------------------------- pure-JAX reference ----------------------------------
def net_ref(x, params):
    WS, BS, WG, BG, WO, BO, WSK, BSK, WD, BD, WF, BF = params
    cur = x.astype(jnp.float32)
    Bn = x.shape[0]
    skips = jnp.zeros((Bn, C_OUT, 1), jnp.float32)
    for nb in range(N_BLOCKS):
        for ng in range(N_GATED):
            L = cur.shape[-1]
            xp = jnp.pad(cur, ((0, 0), (0, 0), (K - 1, 0)))
            gidx = nb * N_GATED + ng
            sig = jnp.zeros((Bn, C_INNER, L), jnp.float32)
            gat = jnp.zeros((Bn, C_INNER, L), jnp.float32)
            for j in range(K):
                win = xp[:, :, j:j + L]
                sig = sig + jnp.einsum('oc,bcl->bol', WS[gidx * K + j], win)
                gat = gat + jnp.einsum('oc,bcl->bol', WG[gidx * K + j], win)
            sig = jax.nn.relu(sig + BS[gidx][None])
            gat = jax.nn.sigmoid(gat + BG[gidx][None])
            gs = sig * gat
            cur = cur + jnp.einsum('oc,bcl->bol', WO[gidx], gs) + BO[gidx][None]
        skips = skips + jnp.einsum('oc,bcl->bol', WSK[nb], cur[:, :, -1:]) + BSK[nb][None]
        L = cur.shape[-1]
        xp = jnp.pad(cur, ((0, 0), (0, 0), (1, 0)))
        Lh = (L - 1) // 2 + 1
        x0 = xp[:, :, 0:2 * Lh:2]
        x1 = xp[:, :, 1:2 * Lh:2]
        cur = (jnp.einsum('oc,bcl->bol', WD[2 * nb], x0)
               + jnp.einsum('oc,bcl->bol', WD[2 * nb + 1], x1)
               + BD[nb][None])
    out = jnp.einsum('oc,bcl->bol', WF, cur) + BF[None]
    return jax.nn.relu(skips + out)


# ----------------------------------------- main ----------------------------------------
if __name__ == "__main__":
    key = jax.random.PRNGKey(0)
    kx, kp = jax.random.split(key)
    x = jax.random.normal(kx, (B, C_IN, L0), jnp.float32)
    params = init_params(kp)

    net_forward = make_net_forward(params)   # host-side fusion/packing done exactly once
    out = net_forward(x)
    out = jax.block_until_ready(out)

    ref = net_ref(x, params)
    assert out.shape == (B, C_OUT, 1)
    np.testing.assert_allclose(np.asarray(out), np.asarray(ref), atol=1e-4, rtol=1e-4)

    print("KERNEL_OK")
</pallas_src>

<mosaic_0001>
module attributes {stable_mosaic.version = 11 : i64} {
  func.func @net_kernel(%arg0: i32, %arg1: memref<32x128xf32, #tpu.memory_space<vmem>>, %arg2: memref<616x64xf32, #tpu.memory_space<vmem>>, %arg3: memref<616x128xf32, #tpu.memory_space<vmem>>, %arg4: memref<8x128xf32, #tpu.memory_space<vmem>>) attributes {dimension_semantics = [#tpu.dimension_semantics<parallel>], iteration_bounds = array<i64: 1>, scalar_prefetch = 0 : i64, scratch_operands = 0 : i64, tpu.core_type = #tpu.core_type<tc>, window_params = [{transform_indices = @transform_0, window_bounds = array<i64: 32, 128>}, {pipeline_mode = #tpu.pipeline_mode<synchronous>, transform_indices = @transform_1, window_bounds = array<i64: 616, 64>}, {pipeline_mode = #tpu.pipeline_mode<synchronous>, transform_indices = @transform_2, window_bounds = array<i64: 616, 128>}, {transform_indices = @transform_3, window_bounds = array<i64: 8, 128>}]} {
    %c0 = arith.constant 0 : index
    %c0_0 = arith.constant 0 : index
    %0 = vector.load %arg1[%c0, %c0_0] : memref<32x128xf32, #tpu.memory_space<vmem>>, vector<32x128xf32>
    %cst = arith.constant 0.000000e+00 : f32
    %1 = vector.broadcast %cst : f32 to vector<8x128xf32>
    %c0_1 = arith.constant 0 : index
    %c0_2 = arith.constant 0 : index
    %2 = vector.load %arg2[%c0_1, %c0_2] : memref<616x64xf32, #tpu.memory_space<vmem>>, vector<128x32xf32>
    %c0_3 = arith.constant 0 : index
    %c0_4 = arith.constant 0 : index
    %3 = vector.load %arg3[%c0_3, %c0_4] : memref<616x128xf32, #tpu.memory_space<vmem>>, vector<128x128xf32>
    %cst_5 = arith.constant dense<0.000000e+00> : vector<128x128xf32>
    %4 = tpu.matmul %2, %0, %cst_5 {dimension_numbers = #tpu.dot_dimension_numbers<[1], [0], [0], [1], [0, 0, 1, 1], [], []>} : vector<128x32xf32>, vector<32x128xf32>, vector<128x128xf32> -> vector<128x128xf32>
    %5 = arith.addf %4, %3 : vector<128x128xf32>
    %6 = vector.extract_strided_slice %5 {offsets = [0, 0], sizes = [64, 128], strides = [1, 1]} : vector<128x128xf32> to vector<64x128xf32>
    %cst_6 = arith.constant 0.000000e+00 : f32
    %7 = vector.broadcast %cst_6 : f32 to vector<64x128xf32>
    %8 = arith.maximumf %6, %7 : vector<64x128xf32>
    %9 = vector.extract_strided_slice %5 {offsets = [64, 0], sizes = [64, 128], strides = [1, 1]} : vector<128x128xf32> to vector<64x128xf32>
    %10 = arith.negf %9 : vector<64x128xf32>
    %11 = math.exp %10 : vector<64x128xf32>
    %cst_7 = arith.constant 1.000000e+00 : f32
    %12 = vector.broadcast %cst_7 : f32 to vector<64x128xf32>
    %13 = arith.addf %12, %11 : vector<64x128xf32>
    %14 = arith.divf %12, %13 : vector<64x128xf32>
    %15 = arith.mulf %8, %14 : vector<64x128xf32>
    %c128 = arith.constant 128 : index
    %c0_8 = arith.constant 0 : index
    %16 = vector.load %arg2[%c128, %c0_8] : memref<616x64xf32, #tpu.memory_space<vmem>>, vector<32x64xf32>
    %c128_9 = arith.constant 128 : index
    %c0_10 = arith.constant 0 : index
    %17 = vector.load %arg3[%c128_9, %c0_10] : memref<616x128xf32, #tpu.memory_space<vmem>>, vector<32x128xf32>
    %cst_11 = arith.constant dense<0.000000e+00> : vector<32x128xf32>
    %18 = tpu.matmul %16, %15, %cst_11 {dimension_numbers = #tpu.dot_dimension_numbers<[1], [0], [0], [1], [0, 0, 1, 1], [], []>} : vector<32x64xf32>, vector<64x128xf32>, vector<32x128xf32> -> vector<32x128xf32>
    %19 = arith.addf %0, %18 : vector<32x128xf32>
    %20 = arith.addf %19, %17 : vector<32x128xf32>
    %c160 = arith.constant 160 : index
    %c0_12 = arith.constant 0 : index
    %21 = vector.load %arg2[%c160, %c0_12] : memref<616x64xf32, #tpu.memory_space<vmem>>, vector<128x32xf32>
    %c160_13 = arith.constant 160 : index
    %c0_14 = arith.constant 0 : index
    %22 = vector.load %arg3[%c160_13, %c0_14] : memref<616x128xf32, #tpu.memory_space<vmem>>, vector<128x128xf32>
    %cst_15 = arith.constant dense<0.000000e+00> : vector<128x128xf32>
    %23 = tpu.matmul %21, %20, %cst_15 {dimension_numbers = #tpu.dot_dimension_numbers<[1], [0], [0], [1], [0, 0, 1, 1], [], []>} : vector<128x32xf32>, vector<32x128xf32>, vector<128x128xf32> -> vector<128x128xf32>
    %24 = arith.addf %23, %22 : vector<128x128xf32>
    %25 = vector.extract_strided_slice %24 {offsets = [0, 0], sizes = [64, 128], strides = [1, 1]} : vector<128x128xf32> to vector<64x128xf32>
    %cst_16 = arith.constant 0.000000e+00 : f32
    %26 = vector.broadcast %cst_16 : f32 to vector<64x128xf32>
    %27 = arith.maximumf %25, %26 : vector<64x128xf32>
    %28 = vector.extract_strided_slice %24 {offsets = [64, 0], sizes = [64, 128], strides = [1, 1]} : vector<128x128xf32> to vector<64x128xf32>
    %29 = arith.negf %28 : vector<64x128xf32>
    %30 = math.exp %29 : vector<64x128xf32>
    %cst_17 = arith.constant 1.000000e+00 : f32
    %31 = vector.broadcast %cst_17 : f32 to vector<64x128xf32>
    %32 = arith.addf %31, %30 : vector<64x128xf32>
    %33 = arith.divf %31, %32 : vector<64x128xf32>
    %34 = arith.mulf %27, %33 : vector<64x128xf32>
    %c288 = arith.constant 288 : index
    %c0_18 = arith.constant 0 : index
    %35 = vector.load %arg2[%c288, %c0_18] : memref<616x64xf32, #tpu.memory_space<vmem>>, vector<32x64xf32>
    %c288_19 = arith.constant 288 : index
    %c0_20 = arith.constant 0 : index
    %36 = vector.load %arg3[%c288_19, %c0_20] : memref<616x128xf32, #tpu.memory_space<vmem>>, vector<32x128xf32>
    %cst_21 = arith.constant dense<0.000000e+00> : vector<32x128xf32>
    %37 = tpu.matmul %35, %34, %cst_21 {dimension_numbers = #tpu.dot_dimension_numbers<[1], [0], [0], [1], [0, 0, 1, 1], [], []>} : vector<32x64xf32>, vector<64x128xf32>, vector<32x128xf32> -> vector<32x128xf32>
    %38 = arith.addf %20, %37 : vector<32x128xf32>
    %39 = arith.addf %38, %36 : vector<32x128xf32>
    %c320 = arith.constant 320 : index
    %c0_22 = arith.constant 0 : index
    %40 = vector.load %arg2[%c320, %c0_22] : memref<616x64xf32, #tpu.memory_space<vmem>>, vector<24x32xf32>
    %c320_23 = arith.constant 320 : index
    %c0_24 = arith.constant 0 : index
    %41 = vector.load %arg3[%c320_23, %c0_24] : memref<616x128xf32, #tpu.memory_space<vmem>>, vector<24x128xf32>
    %cst_25 = arith.constant dense<0.000000e+00> : vector<24x128xf32>
    %42 = tpu.matmul %40, %39, %cst_25 {dimension_numbers = #tpu.dot_dimension_numbers<[1], [0], [0], [1], [0, 0, 1, 1], [], []>} : vector<24x32xf32>, vector<32x128xf32>, vector<24x128xf32> -> vector<24x128xf32>
    %43 = arith.addf %42, %41 : vector<24x128xf32>
    %44 = vector.extract_strided_slice %43 {offsets = [0, 0], sizes = [8, 128], strides = [1, 1]} : vector<24x128xf32> to vector<8x128xf32>
    %45 = arith.addf %1, %44 : vector<8x128xf32>
    %46 = vector.extract_strided_slice %43 {offsets = [8, 0], sizes = [16, 128], strides = [1, 1]} : vector<24x128xf32> to vector<16x128xf32>
    %c344 = arith.constant 344 : index
    %c0_26 = arith.constant 0 : index
    %47 = vector.load %arg2[%c344, %c0_26] : memref<616x64xf32, #tpu.memory_space<vmem>>, vector<64x16xf32>
    %c344_27 = arith.constant 344 : index
    %c0_28 = arith.constant 0 : index
    %48 = vector.load %arg3[%c344_27, %c0_28] : memref<616x128xf32, #tpu.memory_space<vmem>>, vector<64x128xf32>
    %cst_29 = arith.constant dense<0.000000e+00> : vector<64x128xf32>
    %49 = tpu.matmul %47, %46, %cst_29 {dimension_numbers = #tpu.dot_dimension_numbers<[1], [0], [0], [1], [0, 0, 1, 1], [], []>} : vector<64x16xf32>, vector<16x128xf32>, vector<64x128xf32> -> vector<64x128xf32>
    %50 = arith.addf %49, %48 : vector<64x128xf32>
    %51 = vector.extract_strided_slice %50 {offsets = [0, 0], sizes = [32, 128], strides = [1, 1]} : vector<64x128xf32> to vector<32x128xf32>
    %cst_30 = arith.constant 0.000000e+00 : f32
    %52 = vector.broadcast %cst_30 : f32 to vector<32x128xf32>
    %53 = arith.maximumf %51, %52 : vector<32x128xf32>
    %54 = vector.extract_strided_slice %50 {offsets = [32, 0], sizes = [32, 128], strides = [1, 1]} : vector<64x128xf32> to vector<32x128xf32>
    %55 = arith.negf %54 : vector<32x128xf32>
    %56 = math.exp %55 : vector<32x128xf32>
    %cst_31 = arith.constant 1.000000e+00 : f32
    %57 = vector.broadcast %cst_31 : f32 to vector<32x128xf32>
    %58 = arith.addf %57, %56 : vector<32x128xf32>
    %59 = arith.divf %57, %58 : vector<32x128xf32>
    %60 = arith.mulf %53, %59 : vector<32x128xf32>
    %c408 = arith.constant 408 : index
    %c0_32 = arith.constant 0 : index
    %61 = vector.load %arg2[%c408, %c0_32] : memref<616x64xf32, #tpu.memory_space<vmem>>, vector<16x32xf32>
    %c408_33 = arith.constant 408 : index
    %c0_34 = arith.constant 0 : index
    %62 = vector.load %arg3[%c408_33, %c0_34] : memref<616x128xf32, #tpu.memory_space<vmem>>, vector<16x128xf32>
    %cst_35 = arith.constant dense<0.000000e+00> : vector<16x128xf32>
    %63 = tpu.matmul %61, %60, %cst_35 {dimension_numbers = #tpu.dot_dimension_numbers<[1], [0], [0], [1], [0, 0, 1, 1], [], []>} : vector<16x32xf32>, vector<32x128xf32>, vector<16x128xf32> -> vector<16x128xf32>
    %64 = arith.addf %46, %63 : vector<16x128xf32>
    %65 = arith.addf %64, %62 : vector<16x128xf32>
    %c424 = arith.constant 424 : index
    %c0_36 = arith.constant 0 : index
    %66 = vector.load %arg2[%c424, %c0_36] : memref<616x64xf32, #tpu.memory_space<vmem>>, vector<64x16xf32>
    %c424_37 = arith.constant 424 : index
    %c0_38 = arith.constant 0 : index
    %67 = vector.load %arg3[%c424_37, %c0_38] : memref<616x128xf32, #tpu.memory_space<vmem>>, vector<64x128xf32>
    %cst_39 = arith.constant dense<0.000000e+00> : vector<64x128xf32>
    %68 = tpu.matmul %66, %65, %cst_39 {dimension_numbers = #tpu.dot_dimension_numbers<[1], [0], [0], [1], [0, 0, 1, 1], [], []>} : vector<64x16xf32>, vector<16x128xf32>, vector<64x128xf32> -> vector<64x128xf32>
    %69 = arith.addf %68, %67 : vector<64x128xf32>
    %70 = vector.extract_strided_slice %69 {offsets = [0, 0], sizes = [32, 128], strides = [1, 1]} : vector<64x128xf32> to vector<32x128xf32>
    %cst_40 = arith.constant 0.000000e+00 : f32
    %71 = vector.broadcast %cst_40 : f32 to vector<32x128xf32>
    %72 = arith.maximumf %70, %71 : vector<32x128xf32>
    %73 = vector.extract_strided_slice %69 {offsets = [32, 0], sizes = [32, 128], strides = [1, 1]} : vector<64x128xf32> to vector<32x128xf32>
    %74 = arith.negf %73 : vector<32x128xf32>
    %75 = math.exp %74 : vector<32x128xf32>
    %cst_41 = arith.constant 1.000000e+00 : f32
    %76 = vector.broadcast %cst_41 : f32 to vector<32x128xf32>
    %77 = arith.addf %76, %75 : vector<32x128xf32>
    %78 = arith.divf %76, %77 : vector<32x128xf32>
    %79 = arith.mulf %72, %78 : vector<32x128xf32>
    %c488 = arith.constant 488 : index
    %c0_42 = arith.constant 0 : index
    %80 = vector.load %arg2[%c488, %c0_42] : memref<616x64xf32, #tpu.memory_space<vmem>>, vector<16x32xf32>
    %c488_43 = arith.constant 488 : index
    %c0_44 = arith.constant 0 : index
    %81 = vector.load %arg3[%c488_43, %c0_44] : memref<616x128xf32, #tpu.memory_space<vmem>>, vector<16x128xf32>
    %cst_45 = arith.constant dense<0.000000e+00> : vector<16x128xf32>
    %82 = tpu.matmul %80, %79, %cst_45 {dimension_numbers = #tpu.dot_dimension_numbers<[1], [0], [0], [1], [0, 0, 1, 1], [], []>} : vector<16x32xf32>, vector<32x128xf32>, vector<16x128xf32> -> vector<16x128xf32>
    %83 = arith.addf %65, %82 : vector<16x128xf32>
    %84 = arith.addf %83, %81 : vector<16x128xf32>
    %c504 = arith.constant 504 : index
    %c0_46 = arith.constant 0 : index
    %85 = vector.load %arg2[%c504, %c0_46] : memref<616x64xf32, #tpu.memory_space<vmem>>, vector<16x16xf32>
    %c504_47 = arith.constant 504 : index
    %c0_48 = arith.constant 0 : index
    %86 = vector.load %arg3[%c504_47, %c0_48] : memref<616x128xf32, #tpu.memory_space<vmem>>, vector<16x128xf32>
    %cst_49 = arith.constant dense<0.000000e+00> : vector<16x128xf32>
    %87 = tpu.matmul %85, %84, %cst_49 {dimension_numbers = #tpu.dot_dimension_numbers<[1], [0], [0], [1], [0, 0, 1, 1], [], []>} : vector<16x16xf32>, vector<16x128xf32>, vector<16x128xf32> -> vector<16x128xf32>
    %88 = arith.addf %87, %86 : vector<16x128xf32>
    %89 = vector.extract_strided_slice %88 {offsets = [0, 0], sizes = [8, 128], strides = [1, 1]} : vector<16x128xf32> to vector<8x128xf32>
    %90 = arith.addf %45, %89 : vector<8x128xf32>
    %91 = vector.extract_strided_slice %88 {offsets = [8, 0], sizes = [8, 128], strides = [1, 1]} : vector<16x128xf32> to vector<8x128xf32>
    %c520 = arith.constant 520 : index
    %c0_50 = arith.constant 0 : index
    %92 = vector.load %arg2[%c520, %c0_50] : memref<616x64xf32, #tpu.memory_space<vmem>>, vector<32x8xf32>
    %c520_51 = arith.constant 520 : index
    %c0_52 = arith.constant 0 : index
    %93 = vector.load %arg3[%c520_51, %c0_52] : memref<616x128xf32, #tpu.memory_space<vmem>>, vector<32x128xf32>
    %cst_53 = arith.constant dense<0.000000e+00> : vector<32x128xf32>
    %94 = tpu.matmul %92, %91, %cst_53 {dimension_numbers = #tpu.dot_dimension_numbers<[1], [0], [0], [1], [0, 0, 1, 1], [], []>} : vector<32x8xf32>, vector<8x128xf32>, vector<32x128xf32> -> vector<32x128xf32>
    %95 = arith.addf %94, %93 : vector<32x128xf32>
    %96 = vector.extract_strided_slice %95 {offsets = [0, 0], sizes = [16, 128], strides = [1, 1]} : vector<32x128xf32> to vector<16x128xf32>
    %cst_54 = arith.constant 0.000000e+00 : f32
    %97 = vector.broadcast %cst_54 : f32 to vector<16x128xf32>
    %98 = arith.maximumf %96, %97 : vector<16x128xf32>
    %99 = vector.extract_strided_slice %95 {offsets = [16, 0], sizes = [16, 128], strides = [1, 1]} : vector<32x128xf32> to vector<16x128xf32>
    %100 = arith.negf %99 : vector<16x128xf32>
    %101 = math.exp %100 : vector<16x128xf32>
    %cst_55 = arith.constant 1.000000e+00 : f32
    %102 = vector.broadcast %cst_55 : f32 to vector<16x128xf32>
    %103 = arith.addf %102, %101 : vector<16x128xf32>
    %104 = arith.divf %102, %103 : vector<16x128xf32>
    %105 = arith.mulf %98, %104 : vector<16x128xf32>
    %c552 = arith.constant 552 : index
    %c0_56 = arith.constant 0 : index
    %106 = vector.load %arg2[%c552, %c0_56] : memref<616x64xf32, #tpu.memory_space<vmem>>, vector<8x16xf32>
    %c552_57 = arith.constant 552 : index
    %c0_58 = arith.constant 0 : index
    %107 = vector.load %arg3[%c552_57, %c0_58] : memref<616x128xf32, #tpu.memory_space<vmem>>, vector<8x128xf32>
    %cst_59 = arith.constant dense<0.000000e+00> : vector<8x128xf32>
    %108 = tpu.matmul %106, %105, %cst_59 {dimension_numbers = #tpu.dot_dimension_numbers<[1], [0], [0], [1], [0, 0, 1, 1], [], []>} : vector<8x16xf32>, vector<16x128xf32>, vector<8x128xf32> -> vector<8x128xf32>
    %109 = arith.addf %91, %108 : vector<8x128xf32>
    %110 = arith.addf %109, %107 : vector<8x128xf32>
    %c560 = arith.constant 560 : index
    %c0_60 = arith.constant 0 : index
    %111 = vector.load %arg2[%c560, %c0_60] : memref<616x64xf32, #tpu.memory_space<vmem>>, vector<32x8xf32>
    %c560_61 = arith.constant 560 : index
    %c0_62 = arith.constant 0 : index
    %112 = vector.load %arg3[%c560_61, %c0_62] : memref<616x128xf32, #tpu.memory_space<vmem>>, vector<32x128xf32>
    %cst_63 = arith.constant dense<0.000000e+00> : vector<32x128xf32>
    %113 = tpu.matmul %111, %110, %cst_63 {dimension_numbers = #tpu.dot_dimension_numbers<[1], [0], [0], [1], [0, 0, 1, 1], [], []>} : vector<32x8xf32>, vector<8x128xf32>, vector<32x128xf32> -> vector<32x128xf32>
    %114 = arith.addf %113, %112 : vector<32x128xf32>
    %115 = vector.extract_strided_slice %114 {offsets = [0, 0], sizes = [16, 128], strides = [1, 1]} : vector<32x128xf32> to vector<16x128xf32>
    %cst_64 = arith.constant 0.000000e+00 : f32
    %116 = vector.broadcast %cst_64 : f32 to vector<16x128xf32>
    %117 = arith.maximumf %115, %116 : vector<16x128xf32>
    %118 = vector.extract_strided_slice %114 {offsets = [16, 0], sizes = [16, 128], strides = [1, 1]} : vector<32x128xf32> to vector<16x128xf32>
    %119 = arith.negf %118 : vector<16x128xf32>
    %120 = math.exp %119 : vector<16x128xf32>
    %cst_65 = arith.constant 1.000000e+00 : f32
    %121 = vector.broadcast %cst_65 : f32 to vector<16x128xf32>
    %122 = arith.addf %121, %120 : vector<16x128xf32>
    %123 = arith.divf %121, %122 : vector<16x128xf32>
    %124 = arith.mulf %117, %123 : vector<16x128xf32>
    %c592 = arith.constant 592 : index
    %c0_66 = arith.constant 0 : index
    %125 = vector.load %arg2[%c592, %c0_66] : memref<616x64xf32, #tpu.memory_space<vmem>>, vector<8x16xf32>
    %c592_67 = arith.constant 592 : index
    %c0_68 = arith.constant 0 : index
    %126 = vector.load %arg3[%c592_67, %c0_68] : memref<616x128xf32, #tpu.memory_space<vmem>>, vector<8x128xf32>
    %cst_69 = arith.constant dense<0.000000e+00> : vector<8x128xf32>
    %127 = tpu.matmul %125, %124, %cst_69 {dimension_numbers = #tpu.dot_dimension_numbers<[1], [0], [0], [1], [0, 0, 1, 1], [], []>} : vector<8x16xf32>, vector<16x128xf32>, vector<8x128xf32> -> vector<8x128xf32>
    %128 = arith.addf %110, %127 : vector<8x128xf32>
    %129 = arith.addf %128, %126 : vector<8x128xf32>
    %c600 = arith.constant 600 : index
    %c0_70 = arith.constant 0 : index
    %130 = vector.load %arg2[%c600, %c0_70] : memref<616x64xf32, #tpu.memory_space<vmem>>, vector<16x8xf32>
    %c600_71 = arith.constant 600 : index
    %c0_72 = arith.constant 0 : index
    %131 = vector.load %arg3[%c600_71, %c0_72] : memref<616x128xf32, #tpu.memory_space<vmem>>, vector<16x128xf32>
    %cst_73 = arith.constant dense<0.000000e+00> : vector<16x128xf32>
    %132 = tpu.matmul %130, %129, %cst_73 {dimension_numbers = #tpu.dot_dimension_numbers<[1], [0], [0], [1], [0, 0, 1, 1], [], []>} : vector<16x8xf32>, vector<8x128xf32>, vector<16x128xf32> -> vector<16x128xf32>
    %133 = arith.addf %132, %131 : vector<16x128xf32>
    %134 = vector.extract_strided_slice %133 {offsets = [0, 0], sizes = [8, 128], strides = [1, 1]} : vector<16x128xf32> to vector<8x128xf32>
    %135 = arith.addf %90, %134 : vector<8x128xf32>
    %136 = vector.extract_strided_slice %133 {offsets = [8, 0], sizes = [8, 128], strides = [1, 1]} : vector<16x128xf32> to vector<8x128xf32>
    %137 = arith.addf %135, %136 : vector<8x128xf32>
    %cst_74 = arith.constant 0.000000e+00 : f32
    %138 = vector.broadcast %cst_74 : f32 to vector<8x128xf32>
    %139 = arith.maximumf %137, %138 : vector<8x128xf32>
    %c0_75 = arith.constant 0 : index
    %c0_76 = arith.constant 0 : index
    %140 = vector.load %arg4[%c0_75, %c0_76] : memref<8x128xf32, #tpu.memory_space<vmem>>, vector<8x128xf32>
    tpu.vector_store %arg4[%c0_75, %c0_76], %139 {strides = array<i32>} : memref<8x128xf32, #tpu.memory_space<vmem>>, vector<8x128xf32>,
    return
  }
  func.func @transform_0(%arg0: i32) -> (i32, i32) {
    %c0_i32 = arith.constant 0 : i32
    %c0_i32_0 = arith.constant 0 : i32
    return %c0_i32, %arg0 : i32, i32
  }
  func.func @transform_1(%arg0: i32) -> (i32, i32) {
    %c0_i32 = arith.constant 0 : i32
    %c0_i32_0 = arith.constant 0 : i32
    %c0_i32_1 = arith.constant 0 : i32
    return %c0_i32, %c0_i32_0 : i32, i32
  }
  func.func @transform_2(%arg0: i32) -> (i32, i32) {
    %c0_i32 = arith.constant 0 : i32
    %c0_i32_0 = arith.constant 0 : i32
    %c0_i32_1 = arith.constant 0 : i32
    return %c0_i32, %c0_i32_0 : i32, i32
  }
  func.func @transform_3(%arg0: i32) -> (i32, i32) {
    %c0_i32 = arith.constant 0 : i32
    %c0_i32_0 = arith.constant 0 : i32
    return %c0_i32, %arg0 : i32, i32
  }
}

</mosaic_0001>

<llo_original>
// kernel: _net_forward_packed.1
$region0: #{_net_forward_packed.1}
  #allocation0 [shape = 'u32[]', space=smem, size = 0x4, offset = 0x4, fixed_abs, tag = 'smem constant byte address 0x4 - core index']
  #allocation1 [shape = 'u32[72,128]{1,0:T(1,128)}', space=vmem, size = 0x9000, scoped, tag = 'internal scratch']
  %s0 = inlined_call_operand.vmem [shape: f32[32,128], index: 0, kind: input, shape index: {}]
  %s1 = inlined_call_operand.vmem [shape: f32[616,64], index: 1, kind: input, shape index: {}]
  %s2 = inlined_call_operand.vmem [shape: f32[616,128], index: 2, kind: input, shape index: {}]
  %s3 = inlined_call_operand.vmem [shape: f32[8,128], index: 3, kind: output, shape index: {}]
  %s4 = sld [smem:[#allocation0]]
  $region22: #{_net_forward_packed.1} parent=0
    _
  %s6 = ssub.s32 1, %s4
  %s7 = scalar_select 0, %s6, %s4
  // Predicated region
  $region2: #{_net_forward_packed.1} parent=0 // pred_check
    _
  $region3: #{_net_forward_packed.1} parent=0 // pred_check_branch
    %9 = sbr.rel (0) target = $region5
  $region4: #{_net_forward_packed.1} parent=0 // pred_region
    _
  $region5: #{_net_forward_packed.1} parent=0 // pred_fallthru
    _
  // Predicated region
  $region6: #{_net_forward_packed.1} parent=0 // pred_check
    _
  $region7: #{_net_forward_packed.1} parent=0 // pred_check_branch
    %11 = sbr.rel (0) target = $region9
  $region8: #{_net_forward_packed.1} parent=0 // pred_region
    _
  $region9: #{_net_forward_packed.1} parent=0 // pred_fallthru
    _
  // Predicated region
  $region10: #{_net_forward_packed.1} parent=0 // pred_check
    _
  $region11: #{_net_forward_packed.1} parent=0 // pred_check_branch
    %13 = sbr.rel (0) target = $region13
  $region12: #{_net_forward_packed.1} parent=0 // pred_region
    _
  $region13: #{_net_forward_packed.1} parent=0 // pred_fallthru
    _
  %v14 = vld [vmem:[%s0] sm:$0xff]
  %v15 = vld [vmem:[%s0 + $0x8] sm:$0xff]
  %v16 = vld [vmem:[%s0 + $0x10] sm:$0xff]
  %v17 = vld [vmem:[%s0 + $0x18] sm:$0xff]
  %v18 = vld [vmem:[%s1] sm:$0xff]
  %v19 = vld [vmem:[%s1 + $0x8] sm:$0xff]
  %v20 = vld [vmem:[%s1 + $0x10] sm:$0xff]
  %v21 = vld [vmem:[%s1 + $0x18] sm:$0xff]
  %v22 = vld [vmem:[%s1 + $0x20] sm:$0xff]
  %v23 = vld [vmem:[%s1 + $0x28] sm:$0xff]
  %v24 = vld [vmem:[%s1 + $0x30] sm:$0xff]
  %v25 = vld [vmem:[%s1 + $0x38] sm:$0xff]
  %v26 = vld [vmem:[%s1 + $0x40] sm:$0xff]
  %v27 = vld [vmem:[%s1 + $0x48] sm:$0xff]
  %v28 = vld [vmem:[%s1 + $0x50] sm:$0xff]
  %v29 = vld [vmem:[%s1 + $0x58] sm:$0xff]
  %v30 = vld [vmem:[%s1 + $0x60] sm:$0xff]
  %v31 = vld [vmem:[%s1 + $0x68] sm:$0xff]
  %v32 = vld [vmem:[%s1 + $0x70] sm:$0xff]
  %v33 = vld [vmem:[%s1 + $0x78] sm:$0xff]
  %v34 = vld [vmem:[%s2] sm:$0xff]
  %v35 = vld [vmem:[%s2 + $0x8] sm:$0xff]
  %v36 = vld [vmem:[%s2 + $0x10] sm:$0xff]
  %v37 = vld [vmem:[%s2 + $0x18] sm:$0xff]
  %v38 = vld [vmem:[%s2 + $0x20] sm:$0xff]
  %v39 = vld [vmem:[%s2 + $0x28] sm:$0xff]
  %v40 = vld [vmem:[%s2 + $0x30] sm:$0xff]
  %v41 = vld [vmem:[%s2 + $0x38] sm:$0xff]
  %v42 = vld [vmem:[%s2 + $0x40] sm:$0xff]
  %v43 = vld [vmem:[%s2 + $0x48] sm:$0xff]
  %v44 = vld [vmem:[%s2 + $0x50] sm:$0xff]
  %v45 = vld [vmem:[%s2 + $0x58] sm:$0xff]
  %v46 = vld [vmem:[%s2 + $0x60] sm:$0xff]
  %v47 = vld [vmem:[%s2 + $0x68] sm:$0xff]
  %v48 = vld [vmem:[%s2 + $0x70] sm:$0xff]
  %v49 = vld [vmem:[%s2 + $0x78] sm:$0xff]
  %vm50 = vcmask 261120
  %v52 = vsel %vm50, %v18, 0
  %v55 = vsel %vm50, %v19, 0
  %v58 = vsel %vm50, %v20, 0
  %v61 = vsel %vm50, %v21, 0
  %v64 = vsel %vm50, %v22, 0
  %v67 = vsel %vm50, %v23, 0
  %v70 = vsel %vm50, %v24, 0
  %v73 = vsel %vm50, %v25, 0
  %v76 = vsel %vm50, %v26, 0
  %v79 = vsel %vm50, %v27, 0
  %v82 = vsel %vm50, %v28, 0
  %v85 = vsel %vm50, %v29, 0
  %v88 = vsel %vm50, %v30, 0
  %v91 = vsel %vm50, %v31, 0
  %v94 = vsel %vm50, %v32, 0
  %v97 = vsel %vm50, %v33, 0
  %99 = vmatpush.msra.mxu0 0.0
  %100 = vmatpush.msra.mxu0 0.0
  %101 = vmatpush.msra.mxu0 0.0
  %102 = vmatpush.msra.mxu0 0.0
  %103 = vmatpush.msra.mxu0 0.0
  %104 = vmatpush.msra.mxu0 0.0
  %105 = vmatpush.msra.mxu0 0.0
  %106 = vmatpush.msra.mxu0 0.0
  %107 = vmatpush.msra.mxu0 0.0
  %108 = vmatpush.msra.mxu0 0.0
  %109 = vmatpush.msra.mxu0 0.0
  %110 = vmatpush.msra.mxu0 0.0
  %111 = vmatpush.msra.mxu0 %v17
  %112 = vmatpush.msra.mxu0 %v16
  %113 = vmatpush.msra.mxu0 %v15
  %114 = vmatpush.msra.mxu0 %v14
  %115 = vmatmul.f32.gmra.mxu0 %v52
  %v116 = vpop.f32.mrf.mxu0
  %v117 = vadd.f32 %v34, %v116
  %118 = vmatmul.f32.gmra.mxu0 %v55
  %v119 = vpop.f32.mrf.mxu0
  %v120 = vadd.f32 %v35, %v119
  %121 = vmatmul.f32.gmra.mxu0 %v58
  %v122 = vpop.f32.mrf.mxu0
  %v123 = vadd.f32 %v36, %v122
  %124 = vmatmul.f32.gmra.mxu0 %v61
  %v125 = vpop.f32.mrf.mxu0
  %v126 = vadd.f32 %v37, %v125
  %127 = vmatmul.f32.gmra.mxu0 %v64
  %v128 = vpop.f32.mrf.mxu0
  %v129 = vadd.f32 %v38, %v128
  %130 = vmatmul.f32.gmra.mxu0 %v67
  %v131 = vpop.f32.mrf.mxu0
  %v132 = vadd.f32 %v39, %v131
  %133 = vmatmul.f32.gmra.mxu0 %v70
  %v134 = vpop.f32.mrf.mxu0
  %v135 = vadd.f32 %v40, %v134
  %136 = vmatmul.f32.gmra.mxu0 %v73
  %v137 = vpop.f32.mrf.mxu0
  %v138 = vadd.f32 %v41, %v137
  %139 = vmatmul.f32.gmra.mxu0 %v76
  %v140 = vpop.f32.mrf.mxu0
  %v141 = vadd.f32 %v42, %v140
  %142 = vmatmul.f32.gmra.mxu0 %v79
  %v143 = vpop.f32.mrf.mxu0
  %v144 = vadd.f32 %v43, %v143
  %145 = vmatmul.f32.gmra.mxu0 %v82
  %v146 = vpop.f32.mrf.mxu0
  %v147 = vadd.f32 %v44, %v146
  %148 = vmatmul.f32.gmra.mxu0 %v85
  %v149 = vpop.f32.mrf.mxu0
  %v150 = vadd.f32 %v45, %v149
  %151 = vmatmul.f32.gmra.mxu0 %v88
  %v152 = vpop.f32.mrf.mxu0
  %v153 = vadd.f32 %v46, %v152
  %154 = vmatmul.f32.gmra.mxu0 %v91
  %v155 = vpop.f32.mrf.mxu0
  %v156 = vadd.f32 %v47, %v155
  %157 = vmatmul.f32.gmra.mxu0 %v94
  %v158 = vpop.f32.mrf.mxu0
  %v159 = vadd.f32 %v48, %v158
  %160 = vmatmul.f32.gmra.mxu0 %v97
  %v161 = vpop.f32.mrf.mxu0
  %v162 = vadd.f32 %v49, %v161
  %163 = vdwg.mxu0
  %v164 = vmax.f32 %v117, 0.0
  %v165 = vmax.f32 %v120, 0.0
  %v166 = vmax.f32 %v123, 0.0
  %v167 = vmax.f32 %v126, 0.0
  %v168 = vmax.f32 %v129, 0.0
  %v169 = vmax.f32 %v132, 0.0
  %v170 = vmax.f32 %v135, 0.0
  %v171 = vmax.f32 %v138, 0.0
  %v172 = vxor.u32 %v141, 2147483648
  %v173 = vxor.u32 %v144, 2147483648
  %v174 = vxor.u32 %v147, 2147483648
  %v175 = vxor.u32 %v150, 2147483648
  %v176 = vxor.u32 %v153, 2147483648
  %v177 = vxor.u32 %v156, 2147483648
  %v178 = vxor.u32 %v159, 2147483648
  %v179 = vxor.u32 %v162, 2147483648
  %v180 = vmul.f32 %v172, 1.442695
  %v181 = vpow.pop %v180
  %v182 = vmul.f32 %v173, 1.442695
  %v183 = vpow.pop %v182
  %v184 = vmul.f32 %v174, 1.442695
  %v185 = vpow.pop %v184
  %v186 = vmul.f32 %v175, 1.442695
  %v187 = vpow.pop %v186
  %v188 = vmul.f32 %v176, 1.442695
  %v189 = vpow.pop %v188
  %v190 = vmul.f32 %v177, 1.442695
  %v191 = vpow.pop %v190
  %v192 = vmul.f32 %v178, 1.442695
  %v193 = vpow.pop %v192
  %v194 = vmul.f32 %v179, 1.442695
  %v195 = vpow.pop %v194
  %v196 = vadd.f32 %v181, 1.0
  %v197 = vadd.f32 %v183, 1.0
  %v198 = vadd.f32 %v185, 1.0
  %v199 = vadd.f32 %v187, 1.0
  %v200 = vadd.f32 %v189, 1.0
  %v201 = vadd.f32 %v191, 1.0
  %v202 = vadd.f32 %v193, 1.0
  %v203 = vadd.f32 %v195, 1.0
  %v204 = vrcp.pop %v196
  %v205 = vmul.f32 %v196, %v204
  %v206 = vsub.f32 1.0, %v205
  %v207 = vmul.f32 %v204, %v206
  %v208 = vadd.f32 %v204, %v207
  %vm209 = vweird.f32 %v196
  %vm210 = vweird.f32 %v204
  %vm211 = vmor %vm209, %vm210
  %v212 = vsel %vm211, %v204, %v208
  %v213 = vand.u32 2147483647, %v196
  %vm214 = vcmp.eq.f32.partialorder %v213, 8.507059e+37
  %v215 = vand.u32 %v196, 2147483648
  %v216 = vor.u32 1.1754944e-38, %v215
  %v217 = vsel %vm214, %v216, %v212
  %v218 = vmul.f32 1.0, %v217
  %v219 = vrcp.pop %v197
  %v220 = vmul.f32 %v197, %v219
  %v221 = vsub.f32 1.0, %v220
  %v222 = vmul.f32 %v219, %v221
  %v223 = vadd.f32 %v219, %v222
  %vm224 = vweird.f32 %v197
  %vm225 = vweird.f32 %v219
  %vm226 = vmor %vm224, %vm225
  %v227 = vsel %vm226, %v219, %v223
  %v228 = vand.u32 2147483647, %v197
  %vm229 = vcmp.eq.f32.partialorder %v228, 8.507059e+37
  %v230 = vand.u32 %v197, 2147483648
  %v231 = vor.u32 1.1754944e-38, %v230
  %v232 = vsel %vm229, %v231, %v227
  %v233 = vmul.f32 1.0, %v232
  %v234 = vrcp.pop %v198
  %v235 = vmul.f32 %v198, %v234
  %v236 = vsub.f32 1.0, %v235
  %v237 = vmul.f32 %v234, %v236
  %v238 = vadd.f32 %v234, %v237
  %vm239 = vweird.f32 %v198
  %vm240 = vweird.f32 %v234
  %vm241 = vmor %vm239, %vm240
  %v242 = vsel %vm241, %v234, %v238
  %v243 = vand.u32 2147483647, %v198
  %vm244 = vcmp.eq.f32.partialorder %v243, 8.507059e+37
  %v245 = vand.u32 %v198, 2147483648
  %v246 = vor.u32 1.1754944e-38, %v245
  %v247 = vsel %vm244, %v246, %v242
  %v248 = vmul.f32 1.0, %v247
  %v249 = vrcp.pop %v199
  %v250 = vmul.f32 %v199, %v249
  %v251 = vsub.f32 1.0, %v250
  %v252 = vmul.f32 %v249, %v251
  %v253 = vadd.f32 %v249, %v252
  %vm254 = vweird.f32 %v199
  %vm255 = vweird.f32 %v249
  %vm256 = vmor %vm254, %vm255
  %v257 = vsel %vm256, %v249, %v253
  %v258 = vand.u32 2147483647, %v199
  %vm259 = vcmp.eq.f32.partialorder %v258, 8.507059e+37
  %v260 = vand.u32 %v199, 2147483648
  %v261 = vor.u32 1.1754944e-38, %v260
  %v262 = vsel %vm259, %v261, %v257
  %v263 = vmul.f32 1.0, %v262
  %v264 = vrcp.pop %v200
  %v265 = vmul.f32 %v200, %v264
  %v266 = vsub.f32 1.0, %v265
  %v267 = vmul.f32 %v264, %v266
  %v268 = vadd.f32 %v264, %v267
  %vm269 = vweird.f32 %v200
  %vm270 = vweird.f32 %v264
  %vm271 = vmor %vm269, %vm270
  %v272 = vsel %vm271, %v264, %v268
  %v273 = vand.u32 2147483647, %v200
  %vm274 = vcmp.eq.f32.partialorder %v273, 8.507059e+37
  %v275 = vand.u32 %v200, 2147483648
  %v276 = vor.u32 1.1754944e-38, %v275
  %v277 = vsel %vm274, %v276, %v272
  %v278 = vmul.f32 1.0, %v277
  %v279 = vrcp.pop %v201
  %v280 = vmul.f32 %v201, %v279
  %v281 = vsub.f32 1.0, %v280
  %v282 = vmul.f32 %v279, %v281
  %v283 = vadd.f32 %v279, %v282
  %vm284 = vweird.f32 %v201
  %vm285 = vweird.f32 %v279
  %vm286 = vmor %vm284, %vm285
  %v287 = vsel %vm286, %v279, %v283
  %v288 = vand.u32 2147483647, %v201
  %vm289 = vcmp.eq.f32.partialorder %v288, 8.507059e+37
  %v290 = vand.u32 %v201, 2147483648
  %v291 = vor.u32 1.1754944e-38, %v290
  %v292 = vsel %vm289, %v291, %v287
  %v293 = vmul.f32 1.0, %v292
  %v294 = vrcp.pop %v202
  %v295 = vmul.f32 %v202, %v294
  %v296 = vsub.f32 1.0, %v295
  %v297 = vmul.f32 %v294, %v296
  %v298 = vadd.f32 %v294, %v297
  %vm299 = vweird.f32 %v202
  %vm300 = vweird.f32 %v294
  %vm301 = vmor %vm299, %vm300
  %v302 = vsel %vm301, %v294, %v298
  %v303 = vand.u32 2147483647, %v202
  %vm304 = vcmp.eq.f32.partialorder %v303, 8.507059e+37
  %v305 = vand.u32 %v202, 2147483648
  %v306 = vor.u32 1.1754944e-38, %v305
  %v307 = vsel %vm304, %v306, %v302
  %v308 = vmul.f32 1.0, %v307
  %v309 = vrcp.pop %v203
  %v310 = vmul.f32 %v203, %v309
  %v311 = vsub.f32 1.0, %v310
  %v312 = vmul.f32 %v309, %v311
  %v313 = vadd.f32 %v309, %v312
  %vm314 = vweird.f32 %v203
  %vm315 = vweird.f32 %v309
  %vm316 = vmor %vm314, %vm315
  %v317 = vsel %vm316, %v309, %v313
  %v318 = vand.u32 2147483647, %v203
  %vm319 = vcmp.eq.f32.partialorder %v318, 8.507059e+37
  %v320 = vand.u32 %v203, 2147483648
  %v321 = vor.u32 1.1754944e-38, %v320
  %v322 = vsel %vm319, %v321, %v317
  %v323 = vmul.f32 1.0, %v322
  %v324 = vmul.f32 %v164, %v218
  %v325 = vmul.f32 %v165, %v233
  %v326 = vmul.f32 %v166, %v248
  %v327 = vmul.f32 %v167, %v263
  %v328 = vmul.f32 %v168, %v278
  %v329 = vmul.f32 %v169, %v293
  %v330 = vmul.f32 %v170, %v308
  %v331 = vmul.f32 %v171, %v323
  %v332 = vld [vmem:[%s1 + $0x80] sm:$0xff]
  %v333 = vld [vmem:[%s1 + $0x88] sm:$0xff]
  %v334 = vld [vmem:[%s1 + $0x90] sm:$0xff]
  %v335 = vld [vmem:[%s1 + $0x98] sm:$0xff]
  %v336 = vld [vmem:[%s2 + $0x80] sm:$0xff]
  %v337 = vld [vmem:[%s2 + $0x88] sm:$0xff]
  %v338 = vld [vmem:[%s2 + $0x90] sm:$0xff]
  %v339 = vld [vmem:[%s2 + $0x98] sm:$0xff]
  %vm340 = vcmask 523264
  %v342 = vsel %vm340, %v332, 0
  %v345 = vsel %vm340, %v333, 0
  %v348 = vsel %vm340, %v334, 0
  %v351 = vsel %vm340, %v335, 0
  %353 = vmatpush.msra.mxu0 0.0
  %354 = vmatpush.msra.mxu0 0.0
  %355 = vmatpush.msra.mxu0 0.0
  %356 = vmatpush.msra.mxu0 0.0
  %357 = vmatpush.msra.mxu0 0.0
  %358 = vmatpush.msra.mxu0 0.0
  %359 = vmatpush.msra.mxu0 0.0
  %360 = vmatpush.msra.mxu0 0.0
  %361 = vmatpush.msra.mxu0 %v331
  %362 = vmatpush.msra.mxu0 %v330
  %363 = vmatpush.msra.mxu0 %v329
  %364 = vmatpush.msra.mxu0 %v328
  %365 = vmatpush.msra.mxu0 %v327
  %366 = vmatpush.msra.mxu0 %v326
  %367 = vmatpush.msra.mxu0 %v325
  %368 = vmatpush.msra.mxu0 %v324
  %369 = vmatmul.f32.gmra.mxu0 %v342
  %v370 = vpop.f32.mrf.mxu0
  %v371 = vadd.f32 0.0, %v370
  %372 = vmatmul.f32.gmra.mxu0 %v345
  %v373 = vpop.f32.mrf.mxu0
  %v374 = vadd.f32 0.0, %v373
  %375 = vmatmul.f32.gmra.mxu0 %v348
  %v376 = vpop.f32.mrf.mxu0
  %v377 = vadd.f32 0.0, %v376
  %378 = vmatmul.f32.gmra.mxu0 %v351
  %v379 = vpop.f32.mrf.mxu0
  %v380 = vadd.f32 0.0, %v379
  %381 = vdwg.mxu0
  %v382 = vadd.f32 %v14, %v371
  %v383 = vadd.f32 %v15, %v374
  %v384 = vadd.f32 %v16, %v377
  %v385 = vadd.f32 %v17, %v380
  %v386 = vadd.f32 %v382, %v336
  %v387 = vadd.f32 %v383, %v337
  %v388 = vadd.f32 %v384, %v338
  %v389 = vadd.f32 %v385, %v339
  %v390 = vld [vmem:[%s1 + $0xa0] sm:$0xff]
  %v391 = vld [vmem:[%s1 + $0xa8] sm:$0xff]
  %v392 = vld [vmem:[%s1 + $0xb0] sm:$0xff]
  %v393 = vld [vmem:[%s1 + $0xb8] sm:$0xff]
  %v394 = vld [vmem:[%s1 + $0xc0] sm:$0xff]
  %v395 = vld [vmem:[%s1 + $0xc8] sm:$0xff]
  %v396 = vld [vmem:[%s1 + $0xd0] sm:$0xff]
  %v397 = vld [vmem:[%s1 + $0xd8] sm:$0xff]
  %v398 = vld [vmem:[%s1 + $0xe0] sm:$0xff]
  %v399 = vld [vmem:[%s1 + $0xe8] sm:$0xff]
  %v400 = vld [vmem:[%s1 + $0xf0] sm:$0xff]
  %v401 = vld [vmem:[%s1 + $0xf8] sm:$0xff]
  %v402 = vld [vmem:[%s1 + $0x100] sm:$0xff]
  %v403 = vld [vmem:[%s1 + $0x108] sm:$0xff]
  %v404 = vld [vmem:[%s1 + $0x110] sm:$0xff]
  %v405 = vld [vmem:[%s1 + $0x118] sm:$0xff]
  %v406 = vld [vmem:[%s2 + $0xa0] sm:$0xff]
  %v407 = vld [vmem:[%s2 + $0xa8] sm:$0xff]
  %v408 = vld [vmem:[%s2 + $0xb0] sm:$0xff]
  %v409 = vld [vmem:[%s2 + $0xb8] sm:$0xff]
  %v410 = vld [vmem:[%s2 + $0xc0] sm:$0xff]
  %v411 = vld [vmem:[%s2 + $0xc8] sm:$0xff]
  %v412 = vld [vmem:[%s2 + $0xd0] sm:$0xff]
  %v413 = vld [vmem:[%s2 + $0xd8] sm:$0xff]
  %v414 = vld [vmem:[%s2 + $0xe0] sm:$0xff]
  %v415 = vld [vmem:[%s2 + $0xe8] sm:$0xff]
  %v416 = vld [vmem:[%s2 + $0xf0] sm:$0xff]
  %v417 = vld [vmem:[%s2 + $0xf8] sm:$0xff]
  %v418 = vld [vmem:[%s2 + $0x100] sm:$0xff]
  %v419 = vld [vmem:[%s2 + $0x108] sm:$0xff]
  %v420 = vld [vmem:[%s2 + $0x110] sm:$0xff]
  %v421 = vld [vmem:[%s2 + $0x118] sm:$0xff]
  %v423 = vsel %vm50, %v390, 0
  %v426 = vsel %vm50, %v391, 0
  %v429 = vsel %vm50, %v392, 0
  %v432 = vsel %vm50, %v393, 0
  %v435 = vsel %vm50, %v394, 0
  %v438 = vsel %vm50, %v395, 0
  %v441 = vsel %vm50, %v396, 0
  %v444 = vsel %vm50, %v397, 0
  %v447 = vsel %vm50, %v398, 0
  %v450 = vsel %vm50, %v399, 0
  %v453 = vsel %vm50, %v400, 0
  %v456 = vsel %vm50, %v401, 0
  %v459 = vsel %vm50, %v402, 0
  %v462 = vsel %vm50, %v403, 0
  %v465 = vsel %vm50, %v404, 0
  %v468 = vsel %vm50, %v405, 0
  %470 = vmatpush.msra.mxu0 0.0
  %471 = vmatpush.msra.mxu0 0.0
  %472 = vmatpush.msra.mxu0 0.0
  %473 = vmatpush.msra.mxu0 0.0
  %474 = vmatpush.msra.mxu0 0.0
  %475 = vmatpush.msra.mxu0 0.0
  %476 = vmatpush.msra.mxu0 0.0
  %477 = vmatpush.msra.mxu0 0.0
  %478 = vmatpush.msra.mxu0 0.0
  %479 = vmatpush.msra.mxu0 0.0
  %480 = vmatpush.msra.mxu0 0.0
  %481 = vmatpush.msra.mxu0 0.0
  %482 = vmatpush.msra.mxu0 %v389
  %483 = vmatpush.msra.mxu0 %v388
  %484 = vmatpush.msra.mxu0 %v387
  %485 = vmatpush.msra.mxu0 %v386
  %486 = vmatmul.f32.gmra.mxu0 %v423
  %v487 = vpop.f32.mrf.mxu0
  %v488 = vadd.f32 %v406, %v487
  %489 = vmatmul.f32.gmra.mxu0 %v426
  %v490 = vpop.f32.mrf.mxu0
  %v491 = vadd.f32 %v407, %v490
  %492 = vmatmul.f32.gmra.mxu0 %v429
  %v493 = vpop.f32.mrf.mxu0
  %v494 = vadd.f32 %v408, %v493
  %495 = vmatmul.f32.gmra.mxu0 %v432
  %v496 = vpop.f32.mrf.mxu0
  %v497 = vadd.f32 %v409, %v496
  %498 = vmatmul.f32.gmra.mxu0 %v435
  %v499 = vpop.f32.mrf.mxu0
  %v500 = vadd.f32 %v410, %v499
  %501 = vmatmul.f32.gmra.mxu0 %v438
  %v502 = vpop.f32.mrf.mxu0
  %v503 = vadd.f32 %v411, %v502
  %504 = vmatmul.f32.gmra.mxu0 %v441
  %v505 = vpop.f32.mrf.mxu0
  %v506 = vadd.f32 %v412, %v505
  %507 = vmatmul.f32.gmra.mxu0 %v444
  %v508 = vpop.f32.mrf.mxu0
  %v509 = vadd.f32 %v413, %v508
  %510 = vmatmul.f32.gmra.mxu0 %v447
  %v511 = vpop.f32.mrf.mxu0
  %v512 = vadd.f32 %v414, %v511
  %513 = vmatmul.f32.gmra.mxu0 %v450
  %v514 = vpop.f32.mrf.mxu0
  %v515 = vadd.f32 %v415, %v514
  %516 = vmatmul.f32.gmra.mxu0 %v453
  %v517 = vpop.f32.mrf.mxu0
  %v518 = vadd.f32 %v416, %v517
  %519 = vmatmul.f32.gmra.mxu0 %v456
  %v520 = vpop.f32.mrf.mxu0
  %v521 = vadd.f32 %v417, %v520
  %522 = vmatmul.f32.gmra.mxu0 %v459
  %v523 = vpop.f32.mrf.mxu0
  %v524 = vadd.f32 %v418, %v523
  %525 = vmatmul.f32.gmra.mxu0 %v462
  %v526 = vpop.f32.mrf.mxu0
  %v527 = vadd.f32 %v419, %v526
  %528 = vmatmul.f32.gmra.mxu0 %v465
  %v529 = vpop.f32.mrf.mxu0
  %v530 = vadd.f32 %v420, %v529
  %531 = vmatmul.f32.gmra.mxu0 %v468
  %v532 = vpop.f32.mrf.mxu0
  %v533 = vadd.f32 %v421, %v532
  %534 = vdwg.mxu0
  %v535 = vmax.f32 %v488, 0.0
  %v536 = vmax.f32 %v491, 0.0
  %v537 = vmax.f32 %v494, 0.0
  %v538 = vmax.f32 %v497, 0.0
  %v539 = vmax.f32 %v500, 0.0
  %v540 = vmax.f32 %v503, 0.0
  %v541 = vmax.f32 %v506, 0.0
  %v542 = vmax.f32 %v509, 0.0
  %v543 = vxor.u32 %v512, 2147483648
  %v544 = vxor.u32 %v515, 2147483648
  %v545 = vxor.u32 %v518, 2147483648
  %v546 = vxor.u32 %v521, 2147483648
  %v547 = vxor.u32 %v524, 2147483648
  %v548 = vxor.u32 %v527, 2147483648
  %v549 = vxor.u32 %v530, 2147483648
  %v550 = vxor.u32 %v533, 2147483648
  %v551 = vmul.f32 %v543, 1.442695
  %v552 = vpow.pop %v551
  %v553 = vmul.f32 %v544, 1.442695
  %v554 = vpow.pop %v553
  %v555 = vmul.f32 %v545, 1.442695
  %v556 = vpow.pop %v555
  %v557 = vmul.f32 %v546, 1.442695
  %v558 = vpow.pop %v557
  %v559 = vmul.f32 %v547, 1.442695
  %v560 = vpow.pop %v559
  %v561 = vmul.f32 %v548, 1.442695
  %v562 = vpow.pop %v561
  %v563 = vmul.f32 %v549, 1.442695
  %v564 = vpow.pop %v563
  %v565 = vmul.f32 %v550, 1.442695
  %v566 = vpow.pop %v565
  %v567 = vadd.f32 %v552, 1.0
  %v568 = vadd.f32 %v554, 1.0
  %v569 = vadd.f32 %v556, 1.0
  %v570 = vadd.f32 %v558, 1.0
  %v571 = vadd.f32 %v560, 1.0
  %v572 = vadd.f32 %v562, 1.0
  %v573 = vadd.f32 %v564, 1.0
  %v574 = vadd.f32 %v566, 1.0
  %v575 = vrcp.pop %v567
  %v576 = vmul.f32 %v567, %v575
  %v577 = vsub.f32 1.0, %v576
  %v578 = vmul.f32 %v575, %v577
  %v579 = vadd.f32 %v575, %v578
  %vm580 = vweird.f32 %v567
  %vm581 = vweird.f32 %v575
  %vm582 = vmor %vm580, %vm581
  %v583 = vsel %vm582, %v575, %v579
  %v584 = vand.u32 2147483647, %v567
  %vm585 = vcmp.eq.f32.partialorder %v584, 8.507059e+37
  %v586 = vand.u32 %v567, 2147483648
  %v587 = vor.u32 1.1754944e-38, %v586
  %v588 = vsel %vm585, %v587, %v583
  %v589 = vmul.f32 1.0, %v588
  %v590 = vrcp.pop %v568
  %v591 = vmul.f32 %v568, %v590
  %v592 = vsub.f32 1.0, %v591
  %v593 = vmul.f32 %v590, %v592
  %v594 = vadd.f32 %v590, %v593
  %vm595 = vweird.f32 %v568
  %vm596 = vweird.f32 %v590
  %vm597 = vmor %vm595, %vm596
  %v598 = vsel %vm597, %v590, %v594
  %v599 = vand.u32 2147483647, %v568
  %vm600 = vcmp.eq.f32.partialorder %v599, 8.507059e+37
  %v601 = vand.u32 %v568, 2147483648
  %v602 = vor.u32 1.1754944e-38, %v601
  %v603 = vsel %vm600, %v602, %v598
  %v604 = vmul.f32 1.0, %v603
  %v605 = vrcp.pop %v569
  %v606 = vmul.f32 %v569, %v605
  %v607 = vsub.f32 1.0, %v606
  %v608 = vmul.f32 %v605, %v607
  %v609 = vadd.f32 %v605, %v608
  %vm610 = vweird.f32 %v569
  %vm611 = vweird.f32 %v605
  %vm612 = vmor %vm610, %vm611
  %v613 = vsel %vm612, %v605, %v609
  %v614 = vand.u32 2147483647, %v569
  %vm615 = vcmp.eq.f32.partialorder %v614, 8.507059e+37
  %v616 = vand.u32 %v569, 2147483648
  %v617 = vor.u32 1.1754944e-38, %v616
  %v618 = vsel %vm615, %v617, %v613
  %v619 = vmul.f32 1.0, %v618
  %v620 = vrcp.pop %v570
  %v621 = vmul.f32 %v570, %v620
  %v622 = vsub.f32 1.0, %v621
  %v623 = vmul.f32 %v620, %v622
  %v624 = vadd.f32 %v620, %v623
  %vm625 = vweird.f32 %v570
  %vm626 = vweird.f32 %v620
  %vm627 = vmor %vm625, %vm626
  %v628 = vsel %vm627, %v620, %v624
  %v629 = vand.u32 2147483647, %v570
  %vm630 = vcmp.eq.f32.partialorder %v629, 8.507059e+37
  %v631 = vand.u32 %v570, 2147483648
  %v632 = vor.u32 1.1754944e-38, %v631
  %v633 = vsel %vm630, %v632, %v628
  %v634 = vmul.f32 1.0, %v633
  %v635 = vrcp.pop %v571
  %v636 = vmul.f32 %v571, %v635
  %v637 = vsub.f32 1.0, %v636
  %v638 = vmul.f32 %v635, %v637
  %v639 = vadd.f32 %v635, %v638
  %vm640 = vweird.f32 %v571
  %vm641 = vweird.f32 %v635
  %vm642 = vmor %vm640, %vm641
  %v643 = vsel %vm642, %v635, %v639
  %v644 = vand.u32 2147483647, %v571
  %vm645 = vcmp.eq.f32.partialorder %v644, 8.507059e+37
  %v646 = vand.u32 %v571, 2147483648
  %v647 = vor.u32 1.1754944e-38, %v646
  %v648 = vsel %vm645, %v647, %v643
  %v649 = vmul.f32 1.0, %v648
  %v650 = vrcp.pop %v572
  %v651 = vmul.f32 %v572, %v650
  %v652 = vsub.f32 1.0, %v651
  %v653 = vmul.f32 %v650, %v652
  %v654 = vadd.f32 %v650, %v653
  %vm655 = vweird.f32 %v572
  %vm656 = vweird.f32 %v650
  %vm657 = vmor %vm655, %vm656
  %v658 = vsel %vm657, %v650, %v654
  %v659 = vand.u32 2147483647, %v572
  %vm660 = vcmp.eq.f32.partialorder %v659, 8.507059e+37
  %v661 = vand.u32 %v572, 2147483648
  %v662 = vor.u32 1.1754944e-38, %v661
  %v663 = vsel %vm660, %v662, %v658
  %v664 = vmul.f32 1.0, %v663
  %v665 = vrcp.pop %v573
  %v666 = vmul.f32 %v573, %v665
  %v667 = vsub.f32 1.0, %v666
  %v668 = vmul.f32 %v665, %v667
  %v669 = vadd.f32 %v665, %v668
  %vm670 = vweird.f32 %v573
  %vm671 = vweird.f32 %v665
  %vm672 = vmor %vm670, %vm671
  %v673 = vsel %vm672, %v665, %v669
  %v674 = vand.u32 2147483647, %v573
  %vm675 = vcmp.eq.f32.partialorder %v674, 8.507059e+37
  %v676 = vand.u32 %v573, 2147483648
  %v677 = vor.u32 1.1754944e-38, %v676
  %v678 = vsel %vm675, %v677, %v673
  %v679 = vmul.f32 1.0, %v678
  %v680 = vrcp.pop %v574
  %v681 = vmul.f32 %v574, %v680
  %v682 = vsub.f32 1.0, %v681
  %v683 = vmul.f32 %v680, %v682
  %v684 = vadd.f32 %v680, %v683
  %vm685 = vweird.f32 %v574
  %vm686 = vweird.f32 %v680
  %vm687 = vmor %vm685, %vm686
  %v688 = vsel %vm687, %v680, %v684
  %v689 = vand.u32 2147483647, %v574
  %vm690 = vcmp.eq.f32.partialorder %v689, 8.507059e+37
  %v691 = vand.u32 %v574, 2147483648
  %v692 = vor.u32 1.1754944e-38, %v691
  %v693 = vsel %vm690, %v692, %v688
  %v694 = vmul.f32 1.0, %v693
  %v695 = vmul.f32 %v535, %v589
  %v696 = vmul.f32 %v536, %v604
  %v697 = vmul.f32 %v537, %v619
  %v698 = vmul.f32 %v538, %v634
  %v699 = vmul.f32 %v539, %v649
  %v700 = vmul.f32 %v540, %v664
  %v701 = vmul.f32 %v541, %v679
  %v702 = vmul.f32 %v542, %v694
  %v703 = vld [vmem:[%s1 + $0x120] sm:$0xff]
  %v704 = vld [vmem:[%s1 + $0x128] sm:$0xff]
  %v705 = vld [vmem:[%s1 + $0x130] sm:$0xff]
  %v706 = vld [vmem:[%s1 + $0x138] sm:$0xff]
  %v707 = vld [vmem:[%s2 + $0x120] sm:$0xff]
  %v708 = vld [vmem:[%s2 + $0x128] sm:$0xff]
  %v709 = vld [vmem:[%s2 + $0x130] sm:$0xff]
  %v710 = vld [vmem:[%s2 + $0x138] sm:$0xff]
  %v712 = vsel %vm340, %v703, 0
  %v715 = vsel %vm340, %v704, 0
  %v718 = vsel %vm340, %v705, 0
  %v721 = vsel %vm340, %v706, 0
  %723 = vmatpush.msra.mxu0 0.0
  %724 = vmatpush.msra.mxu0 0.0
  %725 = vmatpush.msra.mxu0 0.0
  %726 = vmatpush.msra.mxu0 0.0
  %727 = vmatpush.msra.mxu0 0.0
  %728 = vmatpush.msra.mxu0 0.0
  %729 = vmatpush.msra.mxu0 0.0
  %730 = vmatpush.msra.mxu0 0.0
  %731 = vmatpush.msra.mxu0 %v702
  %732 = vmatpush.msra.mxu0 %v701
  %733 = vmatpush.msra.mxu0 %v700
  %734 = vmatpush.msra.mxu0 %v699
  %735 = vmatpush.msra.mxu0 %v698
  %736 = vmatpush.msra.mxu0 %v697
  %737 = vmatpush.msra.mxu0 %v696
  %738 = vmatpush.msra.mxu0 %v695
  %739 = vmatmul.f32.gmra.mxu0 %v712
  %v740 = vpop.f32.mrf.mxu0
  %v741 = vadd.f32 0.0, %v740
  %742 = vmatmul.f32.gmra.mxu0 %v715
  %v743 = vpop.f32.mrf.mxu0
  %v744 = vadd.f32 0.0, %v743
  %745 = vmatmul.f32.gmra.mxu0 %v718
  %v746 = vpop.f32.mrf.mxu0
  %v747 = vadd.f32 0.0, %v746
  %748 = vmatmul.f32.gmra.mxu0 %v721
  %v749 = vpop.f32.mrf.mxu0
  %v750 = vadd.f32 0.0, %v749
  %751 = vdwg.mxu0
  %v752 = vadd.f32 %v386, %v741
  %v753 = vadd.f32 %v387, %v744
  %v754 = vadd.f32 %v388, %v747
  %v755 = vadd.f32 %v389, %v750
  %v756 = vadd.f32 %v752, %v707
  %v757 = vadd.f32 %v753, %v708
  %v758 = vadd.f32 %v754, %v709
  %v759 = vadd.f32 %v755, %v710
  %v760 = vld [vmem:[%s1 + $0x140] sm:$0xff]
  %v761 = vld [vmem:[%s1 + $0x148] sm:$0xff]
  %v762 = vld [vmem:[%s1 + $0x150] sm:$0xff]
  %v763 = vld [vmem:[%s2 + $0x140] sm:$0xff]
  %v764 = vld [vmem:[%s2 + $0x148] sm:$0xff]
  %v765 = vld [vmem:[%s2 + $0x150] sm:$0xff]
  %v767 = vsel %vm50, %v760, 0
  %v770 = vsel %vm50, %v761, 0
  %v773 = vsel %vm50, %v762, 0
  %775 = vmatpush.msra.mxu0 0.0
  %776 = vmatpush.msra.mxu0 0.0
  %777 = vmatpush.msra.mxu0 0.0
  %778 = vmatpush.msra.mxu0 0.0
  %779 = vmatpush.msra.mxu0 0.0
  %780 = vmatpush.msra.mxu0 0.0
  %781 = vmatpush.msra.mxu0 0.0
  %782 = vmatpush.msra.mxu0 0.0
  %783 = vmatpush.msra.mxu0 0.0
  %784 = vmatpush.msra.mxu0 0.0
  %785 = vmatpush.msra.mxu0 0.0
  %786 = vmatpush.msra.mxu0 0.0
  %787 = vmatpush.msra.mxu0 %v759
  %788 = vmatpush.msra.mxu0 %v758
  %789 = vmatpush.msra.mxu0 %v757
  %790 = vmatpush.msra.mxu0 %v756
  %791 = vmatmul.f32.gmra.mxu0 %v767
  %v792 = vpop.f32.mrf.mxu0
  %v793 = vadd.f32 %v763, %v792
  %794 = vmatmul.f32.gmra.mxu0 %v770
  %v795 = vpop.f32.mrf.mxu0
  %v796 = vadd.f32 %v764, %v795
  %797 = vmatmul.f32.gmra.mxu0 %v773
  %v798 = vpop.f32.mrf.mxu0
  %v799 = vadd.f32 %v765, %v798
  %800 = vdwg.mxu0
  %v801 = vadd.f32 %v793, 0.0
  %v802 = vld [vmem:[%s1 + $0x158] sm:$0xff]
  %v803 = vld [vmem:[%s1 + $0x160] sm:$0xff]
  %v804 = vld [vmem:[%s1 + $0x168] sm:$0xff]
  %v805 = vld [vmem:[%s1 + $0x170] sm:$0xff]
  %v806 = vld [vmem:[%s1 + $0x178] sm:$0xff]
  %v807 = vld [vmem:[%s1 + $0x180] sm:$0xff]
  %v808 = vld [vmem:[%s1 + $0x188] sm:$0xff]
  %v809 = vld [vmem:[%s1 + $0x190] sm:$0xff]
  %v810 = vld [vmem:[%s2 + $0x158] sm:$0xff]
  %v811 = vld [vmem:[%s2 + $0x160] sm:$0xff]
  %v812 = vld [vmem:[%s2 + $0x168] sm:$0xff]
  %v813 = vld [vmem:[%s2 + $0x170] sm:$0xff]
  %v814 = vld [vmem:[%s2 + $0x178] sm:$0xff]
  %v815 = vld [vmem:[%s2 + $0x180] sm:$0xff]
  %v816 = vld [vmem:[%s2 + $0x188] sm:$0xff]
  %v817 = vld [vmem:[%s2 + $0x190] sm:$0xff]
  %vm818 = vcmask 130048
  %v820 = vsel %vm818, %v802, 0
  %v823 = vsel %vm818, %v803, 0
  %v826 = vsel %vm818, %v804, 0
  %v829 = vsel %vm818, %v805, 0
  %v832 = vsel %vm818, %v806, 0
  %v835 = vsel %vm818, %v807, 0
  %v838 = vsel %vm818, %v808, 0
  %v841 = vsel %vm818, %v809, 0
  %843 = vmatpush.msra.mxu0 0.0
  %844 = vmatpush.msra.mxu0 0.0
  %845 = vmatpush.msra.mxu0 0.0
  %846 = vmatpush.msra.mxu0 0.0
  %847 = vmatpush.msra.mxu0 0.0
  %848 = vmatpush.msra.mxu0 0.0
  %849 = vmatpush.msra.mxu0 0.0
  %850 = vmatpush.msra.mxu0 0.0
  %851 = vmatpush.msra.mxu0 0.0
  %852 = vmatpush.msra.mxu0 0.0
  %853 = vmatpush.msra.mxu0 0.0
  %854 = vmatpush.msra.mxu0 0.0
  %855 = vmatpush.msra.mxu0 0.0
  %856 = vmatpush.msra.mxu0 0.0
  %857 = vmatpush.msra.mxu0 %v799
  %858 = vmatpush.msra.mxu0 %v796
  %859 = vmatmul.f32.gmra.mxu0 %v820
  %v860 = vpop.f32.mrf.mxu0
  %v861 = vadd.f32 %v810, %v860
  %862 = vmatmul.f32.gmra.mxu0 %v823
  %v863 = vpop.f32.mrf.mxu0
  %v864 = vadd.f32 %v811, %v863
  %865 = vmatmul.f32.gmra.mxu0 %v826
  %v866 = vpop.f32.mrf.mxu0
  %v867 = vadd.f32 %v812, %v866
  %868 = vmatmul.f32.gmra.mxu0 %v829
  %v869 = vpop.f32.mrf.mxu0
  %v870 = vadd.f32 %v813, %v869
  %871 = vmatmul.f32.gmra.mxu0 %v832
  %v872 = vpop.f32.mrf.mxu0
  %v873 = vadd.f32 %v814, %v872
  %874 = vmatmul.f32.gmra.mxu0 %v835
  %v875 = vpop.f32.mrf.mxu0
  %v876 = vadd.f32 %v815, %v875
  %877 = vmatmul.f32.gmra.mxu0 %v838
  %v878 = vpop.f32.mrf.mxu0
  %v879 = vadd.f32 %v816, %v878
  %880 = vmatmul.f32.gmra.mxu0 %v841
  %v881 = vpop.f32.mrf.mxu0
  %v882 = vadd.f32 %v817, %v881
  %883 = vdwg.mxu0
  %v884 = vmax.f32 %v861, 0.0
  %v885 = vmax.f32 %v864, 0.0
  %v886 = vmax.f32 %v867, 0.0
  %v887 = vmax.f32 %v870, 0.0
  %v888 = vxor.u32 %v873, 2147483648
  %v889 = vxor.u32 %v876, 2147483648
  %v890 = vxor.u32 %v879, 2147483648
  %v891 = vxor.u32 %v882, 2147483648
  %v892 = vmul.f32 %v888, 1.442695
  %v893 = vpow.pop %v892
  %v894 = vmul.f32 %v889, 1.442695
  %v895 = vpow.pop %v894
  %v896 = vmul.f32 %v890, 1.442695
  %v897 = vpow.pop %v896
  %v898 = vmul.f32 %v891, 1.442695
  %v899 = vpow.pop %v898
  %v900 = vadd.f32 %v893, 1.0
  %v901 = vadd.f32 %v895, 1.0
  %v902 = vadd.f32 %v897, 1.0
  %v903 = vadd.f32 %v899, 1.0
  %v904 = vrcp.pop %v900
  %v905 = vmul.f32 %v900, %v904
  %v906 = vsub.f32 1.0, %v905
  %v907 = vmul.f32 %v904, %v906
  %v908 = vadd.f32 %v904, %v907
  %vm909 = vweird.f32 %v900
  %vm910 = vweird.f32 %v904
  %vm911 = vmor %vm909, %vm910
  %v912 = vsel %vm911, %v904, %v908
  %v913 = vand.u32 2147483647, %v900
  %vm914 = vcmp.eq.f32.partialorder %v913, 8.507059e+37
  %v915 = vand.u32 %v900, 2147483648
  %v916 = vor.u32 1.1754944e-38, %v915
  %v917 = vsel %vm914, %v916, %v912
  %v918 = vmul.f32 1.0, %v917
  %v919 = vrcp.pop %v901
  %v920 = vmul.f32 %v901, %v919
  %v921 = vsub.f32 1.0, %v920
  %v922 = vmul.f32 %v919, %v921
  %v923 = vadd.f32 %v919, %v922
  %vm924 = vweird.f32 %v901
  %vm925 = vweird.f32 %v919
  %vm926 = vmor %vm924, %vm925
  %v927 = vsel %vm926, %v919, %v923
  %v928 = vand.u32 2147483647, %v901
  %vm929 = vcmp.eq.f32.partialorder %v928, 8.507059e+37
  %v930 = vand.u32 %v901, 2147483648
  %v931 = vor.u32 1.1754944e-38, %v930
  %v932 = vsel %vm929, %v931, %v927
  %v933 = vmul.f32 1.0, %v932
  %v934 = vrcp.pop %v902
  %v935 = vmul.f32 %v902, %v934
  %v936 = vsub.f32 1.0, %v935
  %v937 = vmul.f32 %v934, %v936
  %v938 = vadd.f32 %v934, %v937
  %vm939 = vweird.f32 %v902
  %vm940 = vweird.f32 %v934
  %vm941 = vmor %vm939, %vm940
  %v942 = vsel %vm941, %v934, %v938
  %v943 = vand.u32 2147483647, %v902
  %vm944 = vcmp.eq.f32.partialorder %v943, 8.507059e+37
  %v945 = vand.u32 %v902, 2147483648
  %v946 = vor.u32 1.1754944e-38, %v945
  %v947 = vsel %vm944, %v946, %v942
  %v948 = vmul.f32 1.0, %v947
  %v949 = vrcp.pop %v903
  %v950 = vmul.f32 %v903, %v949
  %v951 = vsub.f32 1.0, %v950
  %v952 = vmul.f32 %v949, %v951
  %v953 = vadd.f32 %v949, %v952
  %vm954 = vweird.f32 %v903
  %vm955 = vweird.f32 %v949
  %vm956 = vmor %vm954, %vm955
  %v957 = vsel %vm956, %v949, %v953
  %v958 = vand.u32 2147483647, %v903
  %vm959 = vcmp.eq.f32.partialorder %v958, 8.507059e+37
  %v960 = vand.u32 %v903, 2147483648
  %v961 = vor.u32 1.1754944e-38, %v960
  %v962 = vsel %vm959, %v961, %v957
  %v963 = vmul.f32 1.0, %v962
  %v964 = vmul.f32 %v884, %v918
  %v965 = vmul.f32 %v885, %v933
  %v966 = vmul.f32 %v886, %v948
  %v967 = vmul.f32 %v887, %v963
  %v968 = vld [vmem:[%s1 + $0x198] sm:$0xff]
  %v969 = vld [vmem:[%s1 + $0x1a0] sm:$0xff]
  %v970 = vld [vmem:[%s2 + $0x198] sm:$0xff]
  %v971 = vld [vmem:[%s2 + $0x1a0] sm:$0xff]
  %v973 = vsel %vm50, %v968, 0
  %v976 = vsel %vm50, %v969, 0
  %978 = vmatpush.msra.mxu0 0.0
  %979 = vmatpush.msra.mxu0 0.0
  %980 = vmatpush.msra.mxu0 0.0
  %981 = vmatpush.msra.mxu0 0.0
  %982 = vmatpush.msra.mxu0 0.0
  %983 = vmatpush.msra.mxu0 0.0
  %984 = vmatpush.msra.mxu0 0.0
  %985 = vmatpush.msra.mxu0 0.0
  %986 = vmatpush.msra.mxu0 0.0
  %987 = vmatpush.msra.mxu0 0.0
  %988 = vmatpush.msra.mxu0 0.0
  %989 = vmatpush.msra.mxu0 0.0
  %990 = vmatpush.msra.mxu0 %v967
  %991 = vmatpush.msra.mxu0 %v966
  %992 = vmatpush.msra.mxu0 %v965
  %993 = vmatpush.msra.mxu0 %v964
  %994 = vmatmul.f32.gmra.mxu0 %v973
  %v995 = vpop.f32.mrf.mxu0
  %v996 = vadd.f32 0.0, %v995
  %997 = vmatmul.f32.gmra.mxu0 %v976
  %v998 = vpop.f32.mrf.mxu0
  %v999 = vadd.f32 0.0, %v998
  %1000 = vdwg.mxu0
  %v1001 = vadd.f32 %v796, %v996
  %v1002 = vadd.f32 %v799, %v999
  %v1003 = vadd.f32 %v1001, %v970
  %v1004 = vadd.f32 %v1002, %v971
  %v1005 = vld [vmem:[%s1 + $0x1a8] sm:$0xff]
  %v1006 = vld [vmem:[%s1 + $0x1b0] sm:$0xff]
  %v1007 = vld [vmem:[%s1 + $0x1b8] sm:$0xff]
  %v1008 = vld [vmem:[%s1 + $0x1c0] sm:$0xff]
  %v1009 = vld [vmem:[%s1 + $0x1c8] sm:$0xff]
  %v1010 = vld [vmem:[%s1 + $0x1d0] sm:$0xff]
  %v1011 = vld [vmem:[%s1 + $0x1d8] sm:$0xff]
  %v1012 = vld [vmem:[%s1 + $0x1e0] sm:$0xff]
  %v1013 = vld [vmem:[%s2 + $0x1a8] sm:$0xff]
  %v1014 = vld [vmem:[%s2 + $0x1b0] sm:$0xff]
  %v1015 = vld [vmem:[%s2 + $0x1b8] sm:$0xff]
  %v1016 = vld [vmem:[%s2 + $0x1c0] sm:$0xff]
  %v1017 = vld [vmem:[%s2 + $0x1c8] sm:$0xff]
  %v1018 = vld [vmem:[%s2 + $0x1d0] sm:$0xff]
  %v1019 = vld [vmem:[%s2 + $0x1d8] sm:$0xff]
  %v1020 = vld [vmem:[%s2 + $0x1e0] sm:$0xff]
  %v1022 = vsel %vm818, %v1005, 0
  %v1025 = vsel %vm818, %v1006, 0
  %v1028 = vsel %vm818, %v1007, 0
  %v1031 = vsel %vm818, %v1008, 0
  %v1034 = vsel %vm818, %v1009, 0
  %v1037 = vsel %vm818, %v1010, 0
  %v1040 = vsel %vm818, %v1011, 0
  %v1043 = vsel %vm818, %v1012, 0
  %1045 = vmatpush.msra.mxu0 0.0
  %1046 = vmatpush.msra.mxu0 0.0
  %1047 = vmatpush.msra.mxu0 0.0
  %1048 = vmatpush.msra.mxu0 0.0
  %1049 = vmatpush.msra.mxu0 0.0
  %1050 = vmatpush.msra.mxu0 0.0
  %1051 = vmatpush.msra.mxu0 0.0
  %1052 = vmatpush.msra.mxu0 0.0
  %1053 = vmatpush.msra.mxu0 0.0
  %1054 = vmatpush.msra.mxu0 0.0
  %1055 = vmatpush.msra.mxu0 0.0
  %1056 = vmatpush.msra.mxu0 0.0
  %1057 = vmatpush.msra.mxu0 0.0
  %1058 = vmatpush.msra.mxu0 0.0
  %1059 = vmatpush.msra.mxu0 %v1004
  %1060 = vmatpush.msra.mxu0 %v1003
  %1061 = vmatmul.f32.gmra.mxu0 %v1022
  %v1062 = vpop.f32.mrf.mxu0
  %v1063 = vadd.f32 %v1013, %v1062
  %1064 = vmatmul.f32.gmra.mxu0 %v1025
  %v1065 = vpop.f32.mrf.mxu0
  %v1066 = vadd.f32 %v1014, %v1065
  %1067 = vmatmul.f32.gmra.mxu0 %v1028
  %v1068 = vpop.f32.mrf.mxu0
  %v1069 = vadd.f32 %v1015, %v1068
  %1070 = vmatmul.f32.gmra.mxu0 %v1031
  %v1071 = vpop.f32.mrf.mxu0
  %v1072 = vadd.f32 %v1016, %v1071
  %1073 = vmatmul.f32.gmra.mxu0 %v1034
  %v1074 = vpop.f32.mrf.mxu0
  %v1075 = vadd.f32 %v1017, %v1074
  %1076 = vmatmul.f32.gmra.mxu0 %v1037
  %v1077 = vpop.f32.mrf.mxu0
  %v1078 = vadd.f32 %v1018, %v1077
  %1079 = vmatmul.f32.gmra.mxu0 %v1040
  %v1080 = vpop.f32.mrf.mxu0
  %v1081 = vadd.f32 %v1019, %v1080
  %1082 = vmatmul.f32.gmra.mxu0 %v1043
  %v1083 = vpop.f32.mrf.mxu0
  %v1084 = vadd.f32 %v1020, %v1083
  %1085 = vdwg.mxu0
  %v1086 = vmax.f32 %v1063, 0.0
  %v1087 = vmax.f32 %v1066, 0.0
  %v1088 = vmax.f32 %v1069, 0.0
  %v1089 = vmax.f32 %v1072, 0.0
  %v1090 = vxor.u32 %v1075, 2147483648
  %v1091 = vxor.u32 %v1078, 2147483648
  %v1092 = vxor.u32 %v1081, 2147483648
  %v1093 = vxor.u32 %v1084, 2147483648
  %v1094 = vmul.f32 %v1090, 1.442695
  %v1095 = vpow.pop %v1094
  %v1096 = vmul.f32 %v1091, 1.442695
  %v1097 = vpow.pop %v1096
  %v1098 = vmul.f32 %v1092, 1.442695
  %v1099 = vpow.pop %v1098
  %v1100 = vmul.f32 %v1093, 1.442695
  %v1101 = vpow.pop %v1100
  %v1102 = vadd.f32 %v1095, 1.0
  %v1103 = vadd.f32 %v1097, 1.0
  %v1104 = vadd.f32 %v1099, 1.0
  %v1105 = vadd.f32 %v1101, 1.0
  %v1106 = vrcp.pop %v1102
  %v1107 = vmul.f32 %v1102, %v1106
  %v1108 = vsub.f32 1.0, %v1107
  %v1109 = vmul.f32 %v1106, %v1108
  %v1110 = vadd.f32 %v1106, %v1109
  %vm1111 = vweird.f32 %v1102
  %vm1112 = vweird.f32 %v1106
  %vm1113 = vmor %vm1111, %vm1112
  %v1114 = vsel %vm1113, %v1106, %v1110
  %v1115 = vand.u32 2147483647, %v1102
  %vm1116 = vcmp.eq.f32.partialorder %v1115, 8.507059e+37
  %v1117 = vand.u32 %v1102, 2147483648
  %v1118 = vor.u32 1.1754944e-38, %v1117
  %v1119 = vsel %vm1116, %v1118, %v1114
  %v1120 = vmul.f32 1.0, %v1119
  %v1121 = vrcp.pop %v1103
  %v1122 = vmul.f32 %v1103, %v1121
  %v1123 = vsub.f32 1.0, %v1122
  %v1124 = vmul.f32 %v1121, %v1123
  %v1125 = vadd.f32 %v1121, %v1124
  %vm1126 = vweird.f32 %v1103
  %vm1127 = vweird.f32 %v1121
  %vm1128 = vmor %vm1126, %vm1127
  %v1129 = vsel %vm1128, %v1121, %v1125
  %v1130 = vand.u32 2147483647, %v1103
  %vm1131 = vcmp.eq.f32.partialorder %v1130, 8.507059e+37
  %v1132 = vand.u32 %v1103, 2147483648
  %v1133 = vor.u32 1.1754944e-38, %v1132
  %v1134 = vsel %vm1131, %v1133, %v1129
  %v1135 = vmul.f32 1.0, %v1134
  %v1136 = vrcp.pop %v1104
  %v1137 = vmul.f32 %v1104, %v1136
  %v1138 = vsub.f32 1.0, %v1137
  %v1139 = vmul.f32 %v1136, %v1138
  %v1140 = vadd.f32 %v1136, %v1139
  %vm1141 = vweird.f32 %v1104
  %vm1142 = vweird.f32 %v1136
  %vm1143 = vmor %vm1141, %vm1142
  %v1144 = vsel %vm1143, %v1136, %v1140
  %v1145 = vand.u32 2147483647, %v1104
  %vm1146 = vcmp.eq.f32.partialorder %v1145, 8.507059e+37
  %v1147 = vand.u32 %v1104, 2147483648
  %v1148 = vor.u32 1.1754944e-38, %v1147
  %v1149 = vsel %vm1146, %v1148, %v1144
  %v1150 = vmul.f32 1.0, %v1149
  %v1151 = vrcp.pop %v1105
  %v1152 = vmul.f32 %v1105, %v1151
  %v1153 = vsub.f32 1.0, %v1152
  %v1154 = vmul.f32 %v1151, %v1153
  %v1155 = vadd.f32 %v1151, %v1154
  %vm1156 = vweird.f32 %v1105
  %vm1157 = vweird.f32 %v1151
  %vm1158 = vmor %vm1156, %vm1157
  %v1159 = vsel %vm1158, %v1151, %v1155
  %v1160 = vand.u32 2147483647, %v1105
  %vm1161 = vcmp.eq.f32.partialorder %v1160, 8.507059e+37
  %v1162 = vand.u32 %v1105, 2147483648
  %v1163 = vor.u32 1.1754944e-38, %v1162
  %v1164 = vsel %vm1161, %v1163, %v1159
  %v1165 = vmul.f32 1.0, %v1164
  %v1166 = vmul.f32 %v1086, %v1120
  %v1167 = vmul.f32 %v1087, %v1135
  %v1168 = vmul.f32 %v1088, %v1150
  %v1169 = vmul.f32 %v1089, %v1165
  %v1170 = vld [vmem:[%s1 + $0x1e8] sm:$0xff]
  %v1171 = vld [vmem:[%s1 + $0x1f0] sm:$0xff]
  %v1172 = vld [vmem:[%s2 + $0x1e8] sm:$0xff]
  %v1173 = vld [vmem:[%s2 + $0x1f0] sm:$0xff]
  %v1175 = vsel %vm50, %v1170, 0
  %v1178 = vsel %vm50, %v1171, 0
  %1180 = vmatpush.msra.mxu0 0.0
  %1181 = vmatpush.msra.mxu0 0.0
  %1182 = vmatpush.msra.mxu0 0.0
  %1183 = vmatpush.msra.mxu0 0.0
  %1184 = vmatpush.msra.mxu0 0.0
  %1185 = vmatpush.msra.mxu0 0.0
  %1186 = vmatpush.msra.mxu0 0.0
  %1187 = vmatpush.msra.mxu0 0.0
  %1188 = vmatpush.msra.mxu0 0.0
  %1189 = vmatpush.msra.mxu0 0.0
  %1190 = vmatpush.msra.mxu0 0.0
  %1191 = vmatpush.msra.mxu0 0.0
  %1192 = vmatpush.msra.mxu0 %v1169
  %1193 = vmatpush.msra.mxu0 %v1168
  %1194 = vmatpush.msra.mxu0 %v1167
  %1195 = vmatpush.msra.mxu0 %v1166
  %1196 = vmatmul.f32.gmra.mxu0 %v1175
  %v1197 = vpop.f32.mrf.mxu0
  %v1198 = vadd.f32 0.0, %v1197
  %1199 = vmatmul.f32.gmra.mxu0 %v1178
  %v1200 = vpop.f32.mrf.mxu0
  %v1201 = vadd.f32 0.0, %v1200
  %1202 = vdwg.mxu0
  %v1203 = vadd.f32 %v1003, %v1198
  %v1204 = vadd.f32 %v1004, %v1201
  %v1205 = vadd.f32 %v1203, %v1172
  %v1206 = vadd.f32 %v1204, %v1173
  %v1207 = vld [vmem:[%s1 + $0x1f8] sm:$0xff]
  %v1208 = vld [vmem:[%s1 + $0x200] sm:$0xff]
  %v1209 = vld [vmem:[%s2 + $0x1f8] sm:$0xff]
  %v1210 = vld [vmem:[%s2 + $0x200] sm:$0xff]
  %v1212 = vsel %vm818, %v1207, 0
  %v1215 = vsel %vm818, %v1208, 0
  %1217 = vmatpush.msra.mxu0 0.0
  %1218 = vmatpush.msra.mxu0 0.0
  %1219 = vmatpush.msra.mxu0 0.0
  %1220 = vmatpush.msra.mxu0 0.0
  %1221 = vmatpush.msra.mxu0 0.0
  %1222 = vmatpush.msra.mxu0 0.0
  %1223 = vmatpush.msra.mxu0 0.0
  %1224 = vmatpush.msra.mxu0 0.0
  %1225 = vmatpush.msra.mxu0 0.0
  %1226 = vmatpush.msra.mxu0 0.0
  %1227 = vmatpush.msra.mxu0 0.0
  %1228 = vmatpush.msra.mxu0 0.0
  %1229 = vmatpush.msra.mxu0 0.0
  %1230 = vmatpush.msra.mxu0 0.0
  %1231 = vmatpush.msra.mxu0 %v1206
  %1232 = vmatpush.msra.mxu0 %v1205
  %1233 = vmatmul.f32.gmra.mxu0 %v1212
  %v1234 = vpop.f32.mrf.mxu0
  %v1235 = vadd.f32 %v1209, %v1234
  %1236 = vmatmul.f32.gmra.mxu0 %v1215
  %v1237 = vpop.f32.mrf.mxu0
  %v1238 = vadd.f32 %v1210, %v1237
  %1239 = vdwg.mxu0
  %v1240 = vadd.f32 %v801, %v1235
  %v1241 = vld [vmem:[%s1 + $0x208] sm:$0xff]
  %v1242 = vld [vmem:[%s1 + $0x210] sm:$0xff]
  %v1243 = vld [vmem:[%s1 + $0x218] sm:$0xff]
  %v1244 = vld [vmem:[%s1 + $0x220] sm:$0xff]
  %v1245 = vld [vmem:[%s2 + $0x208] sm:$0xff]
  %v1246 = vld [vmem:[%s2 + $0x210] sm:$0xff]
  %v1247 = vld [vmem:[%s2 + $0x218] sm:$0xff]
  %v1248 = vld [vmem:[%s2 + $0x220] sm:$0xff]
  %vm1249 = vcmask 64512
  %v1251 = vsel %vm1249, %v1241, 0
  %v1254 = vsel %vm1249, %v1242, 0
  %v1257 = vsel %vm1249, %v1243, 0
  %v1260 = vsel %vm1249, %v1244, 0
  %1262 = vmatpush.msra.mxu0 0.0
  %1263 = vmatpush.msra.mxu0 0.0
  %1264 = vmatpush.msra.mxu0 0.0
  %1265 = vmatpush.msra.mxu0 0.0
  %1266 = vmatpush.msra.mxu0 0.0
  %1267 = vmatpush.msra.mxu0 0.0
  %1268 = vmatpush.msra.mxu0 0.0
  %1269 = vmatpush.msra.mxu0 0.0
  %1270 = vmatpush.msra.mxu0 0.0
  %1271 = vmatpush.msra.mxu0 0.0
  %1272 = vmatpush.msra.mxu0 0.0
  %1273 = vmatpush.msra.mxu0 0.0
  %1274 = vmatpush.msra.mxu0 0.0
  %1275 = vmatpush.msra.mxu0 0.0
  %1276 = vmatpush.msra.mxu0 0.0
  %1277 = vmatpush.msra.mxu0 %v1238
  %1278 = vmatmul.f32.gmra.mxu0 %v1251
  %v1279 = vpop.f32.mrf.mxu0
  %v1280 = vadd.f32 %v1245, %v1279
  %1281 = vmatmul.f32.gmra.mxu0 %v1254
  %v1282 = vpop.f32.mrf.mxu0
  %v1283 = vadd.f32 %v1246, %v1282
  %1284 = vmatmul.f32.gmra.mxu0 %v1257
  %v1285 = vpop.f32.mrf.mxu0
  %v1286 = vadd.f32 %v1247, %v1285
  %1287 = vmatmul.f32.gmra.mxu0 %v1260
  %v1288 = vpop.f32.mrf.mxu0
  %v1289 = vadd.f32 %v1248, %v1288
  %1290 = vdwg.mxu0
  %v1291 = vmax.f32 %v1280, 0.0
  %v1292 = vmax.f32 %v1283, 0.0
  %v1293 = vxor.u32 %v1286, 2147483648
  %v1294 = vxor.u32 %v1289, 2147483648
  %v1295 = vmul.f32 %v1293, 1.442695
  %v1296 = vpow.pop %v1295
  %v1297 = vmul.f32 %v1294, 1.442695
  %v1298 = vpow.pop %v1297
  %v1299 = vadd.f32 %v1296, 1.0
  %v1300 = vadd.f32 %v1298, 1.0
  %v1301 = vrcp.pop %v1299
  %v1302 = vmul.f32 %v1299, %v1301
  %v1303 = vsub.f32 1.0, %v1302
  %v1304 = vmul.f32 %v1301, %v1303
  %v1305 = vadd.f32 %v1301, %v1304
  %vm1306 = vweird.f32 %v1299
  %vm1307 = vweird.f32 %v1301
  %vm1308 = vmor %vm1306, %vm1307
  %v1309 = vsel %vm1308, %v1301, %v1305
  %v1310 = vand.u32 2147483647, %v1299
  %vm1311 = vcmp.eq.f32.partialorder %v1310, 8.507059e+37
  %v1312 = vand.u32 %v1299, 2147483648
  %v1313 = vor.u32 1.1754944e-38, %v1312
  %v1314 = vsel %vm1311, %v1313, %v1309
  %v1315 = vmul.f32 1.0, %v1314
  %v1316 = vrcp.pop %v1300
  %v1317 = vmul.f32 %v1300, %v1316
  %v1318 = vsub.f32 1.0, %v1317
  %v1319 = vmul.f32 %v1316, %v1318
  %v1320 = vadd.f32 %v1316, %v1319
  %vm1321 = vweird.f32 %v1300
  %vm1322 = vweird.f32 %v1316
  %vm1323 = vmor %vm1321, %vm1322
  %v1324 = vsel %vm1323, %v1316, %v1320
  %v1325 = vand.u32 2147483647, %v1300
  %vm1326 = vcmp.eq.f32.partialorder %v1325, 8.507059e+37
  %v1327 = vand.u32 %v1300, 2147483648
  %v1328 = vor.u32 1.1754944e-38, %v1327
  %v1329 = vsel %vm1326, %v1328, %v1324
  %v1330 = vmul.f32 1.0, %v1329
  %v1331 = vmul.f32 %v1291, %v1315
  %v1332 = vmul.f32 %v1292, %v1330
  %v1333 = vld [vmem:[%s1 + $0x228] sm:$0xff]
  %v1334 = vld [vmem:[%s2 + $0x228] sm:$0xff]
  %v1336 = vsel %vm818, %v1333, 0
  %1338 = vmatpush.msra.mxu0 0.0
  %1339 = vmatpush.msra.mxu0 0.0
  %1340 = vmatpush.msra.mxu0 0.0
  %1341 = vmatpush.msra.mxu0 0.0
  %1342 = vmatpush.msra.mxu0 0.0
  %1343 = vmatpush.msra.mxu0 0.0
  %1344 = vmatpush.msra.mxu0 0.0
  %1345 = vmatpush.msra.mxu0 0.0
  %1346 = vmatpush.msra.mxu0 0.0
  %1347 = vmatpush.msra.mxu0 0.0
  %1348 = vmatpush.msra.mxu0 0.0
  %1349 = vmatpush.msra.mxu0 0.0
  %1350 = vmatpush.msra.mxu0 0.0
  %1351 = vmatpush.msra.mxu0 0.0
  %1352 = vmatpush.msra.mxu0 %v1332
  %1353 = vmatpush.msra.mxu0 %v1331
  %1354 = vmatmul.f32.gmra.mxu0 %v1336
  %v1355 = vpop.f32.mrf.mxu0
  %v1356 = vadd.f32 0.0, %v1355
  %1357 = vdwg.mxu0
  %v1358 = vadd.f32 %v1238, %v1356
  %v1359 = vadd.f32 %v1358, %v1334
  %v1360 = vld [vmem:[%s1 + $0x230] sm:$0xff]
  %v1361 = vld [vmem:[%s1 + $0x238] sm:$0xff]
  %v1362 = vld [vmem:[%s1 + $0x240] sm:$0xff]
  %v1363 = vld [vmem:[%s1 + $0x248] sm:$0xff]
  %v1364 = vld [vmem:[%s2 + $0x230] sm:$0xff]
  %v1365 = vld [vmem:[%s2 + $0x238] sm:$0xff]
  %v1366 = vld [vmem:[%s2 + $0x240] sm:$0xff]
  %v1367 = vld [vmem:[%s2 + $0x248] sm:$0xff]
  %v1369 = vsel %vm1249, %v1360, 0
  %v1372 = vsel %vm1249, %v1361, 0
  %v1375 = vsel %vm1249, %v1362, 0
  %v1378 = vsel %vm1249, %v1363, 0
  %1380 = vmatpush.msra.mxu0 0.0
  %1381 = vmatpush.msra.mxu0 0.0
  %1382 = vmatpush.msra.mxu0 0.0
  %1383 = vmatpush.msra.mxu0 0.0
  %1384 = vmatpush.msra.mxu0 0.0
  %1385 = vmatpush.msra.mxu0 0.0
  %1386 = vmatpush.msra.mxu0 0.0
  %1387 = vmatpush.msra.mxu0 0.0
  %1388 = vmatpush.msra.mxu0 0.0
  %1389 = vmatpush.msra.mxu0 0.0
  %1390 = vmatpush.msra.mxu0 0.0
  %1391 = vmatpush.msra.mxu0 0.0
  %1392 = vmatpush.msra.mxu0 0.0
  %1393 = vmatpush.msra.mxu0 0.0
  %1394 = vmatpush.msra.mxu0 0.0
  %1395 = vmatpush.msra.mxu0 %v1359
  %1396 = vmatmul.f32.gmra.mxu0 %v1369
  %v1397 = vpop.f32.mrf.mxu0
  %v1398 = vadd.f32 %v1364, %v1397
  %1399 = vmatmul.f32.gmra.mxu0 %v1372
  %v1400 = vpop.f32.mrf.mxu0
  %v1401 = vadd.f32 %v1365, %v1400
  %1402 = vmatmul.f32.gmra.mxu0 %v1375
  %v1403 = vpop.f32.mrf.mxu0
  %v1404 = vadd.f32 %v1366, %v1403
  %1405 = vmatmul.f32.gmra.mxu0 %v1378
  %v1406 = vpop.f32.mrf.mxu0
  %v1407 = vadd.f32 %v1367, %v1406
  %1408 = vdwg.mxu0
  %v1409 = vmax.f32 %v1398, 0.0
  %v1410 = vmax.f32 %v1401, 0.0
  %v1411 = vxor.u32 %v1404, 2147483648
  %v1412 = vxor.u32 %v1407, 2147483648
  %v1413 = vmul.f32 %v1411, 1.442695
  %v1414 = vpow.pop %v1413
  %v1415 = vmul.f32 %v1412, 1.442695
  %v1416 = vpow.pop %v1415
  %v1417 = vadd.f32 %v1414, 1.0
  %v1418 = vadd.f32 %v1416, 1.0
  %v1419 = vrcp.pop %v1417
  %v1420 = vmul.f32 %v1417, %v1419
  %v1421 = vsub.f32 1.0, %v1420
  %v1422 = vmul.f32 %v1419, %v1421
  %v1423 = vadd.f32 %v1419, %v1422
  %vm1424 = vweird.f32 %v1417
  %vm1425 = vweird.f32 %v1419
  %vm1426 = vmor %vm1424, %vm1425
  %v1427 = vsel %vm1426, %v1419, %v1423
  %v1428 = vand.u32 2147483647, %v1417
  %vm1429 = vcmp.eq.f32.partialorder %v1428, 8.507059e+37
  %v1430 = vand.u32 %v1417, 2147483648
  %v1431 = vor.u32 1.1754944e-38, %v1430
  %v1432 = vsel %vm1429, %v1431, %v1427
  %v1433 = vmul.f32 1.0, %v1432
  %v1434 = vrcp.pop %v1418
  %v1435 = vmul.f32 %v1418, %v1434
  %v1436 = vsub.f32 1.0, %v1435
  %v1437 = vmul.f32 %v1434, %v1436
  %v1438 = vadd.f32 %v1434, %v1437
  %vm1439 = vweird.f32 %v1418
  %vm1440 = vweird.f32 %v1434
  %vm1441 = vmor %vm1439, %vm1440
  %v1442 = vsel %vm1441, %v1434, %v1438
  %v1443 = vand.u32 2147483647, %v1418
  %vm1444 = vcmp.eq.f32.partialorder %v1443, 8.507059e+37
  %v1445 = vand.u32 %v1418, 2147483648
  %v1446 = vor.u32 1.1754944e-38, %v1445
  %v1447 = vsel %vm1444, %v1446, %v1442
  %v1448 = vmul.f32 1.0, %v1447
  %v1449 = vmul.f32 %v1409, %v1433
  %v1450 = vmul.f32 %v1410, %v1448
  %v1451 = vld [vmem:[%s1 + $0x250] sm:$0xff]
  %v1452 = vld [vmem:[%s2 + $0x250] sm:$0xff]
  %v1454 = vsel %vm818, %v1451, 0
  %1456 = vmatpush.msra.mxu0 0.0
  %1457 = vmatpush.msra.mxu0 0.0
  %1458 = vmatpush.msra.mxu0 0.0
  %1459 = vmatpush.msra.mxu0 0.0
  %1460 = vmatpush.msra.mxu0 0.0
  %1461 = vmatpush.msra.mxu0 0.0
  %1462 = vmatpush.msra.mxu0 0.0
  %1463 = vmatpush.msra.mxu0 0.0
  %1464 = vmatpush.msra.mxu0 0.0
  %1465 = vmatpush.msra.mxu0 0.0
  %1466 = vmatpush.msra.mxu0 0.0
  %1467 = vmatpush.msra.mxu0 0.0
  %1468 = vmatpush.msra.mxu0 0.0
  %1469 = vmatpush.msra.mxu0 0.0
  %1470 = vmatpush.msra.mxu0 %v1450
  %1471 = vmatpush.msra.mxu0 %v1449
  %1472 = vmatmul.f32.gmra.mxu0 %v1454
  %v1473 = vpop.f32.mrf.mxu0
  %v1474 = vadd.f32 0.0, %v1473
  %1475 = vdwg.mxu0
  %v1476 = vadd.f32 %v1359, %v1474
  %v1477 = vadd.f32 %v1476, %v1452
  %v1478 = vld [vmem:[%s1 + $0x258] sm:$0xff]
  %v1479 = vld [vmem:[%s1 + $0x260] sm:$0xff]
  %v1480 = vld [vmem:[%s2 + $0x258] sm:$0xff]
  %v1481 = vld [vmem:[%s2 + $0x260] sm:$0xff]
  %v1483 = vsel %vm1249, %v1478, 0
  %v1486 = vsel %vm1249, %v1479, 0
  %1488 = vmatpush.msra.mxu0 0.0
  %1489 = vmatpush.msra.mxu0 0.0
  %1490 = vmatpush.msra.mxu0 0.0
  %1491 = vmatpush.msra.mxu0 0.0
  %1492 = vmatpush.msra.mxu0 0.0
  %1493 = vmatpush.msra.mxu0 0.0
  %1494 = vmatpush.msra.mxu0 0.0
  %1495 = vmatpush.msra.mxu0 0.0
  %1496 = vmatpush.msra.mxu0 0.0
  %1497 = vmatpush.msra.mxu0 0.0
  %1498 = vmatpush.msra.mxu0 0.0
  %1499 = vmatpush.msra.mxu0 0.0
  %1500 = vmatpush.msra.mxu0 0.0
  %1501 = vmatpush.msra.mxu0 0.0
  %1502 = vmatpush.msra.mxu0 0.0
  %1503 = vmatpush.msra.mxu0 %v1477
  %1504 = vmatmul.f32.gmra.mxu0 %v1483
  %v1505 = vpop.f32.mrf.mxu0
  %v1506 = vadd.f32 %v1480, %v1505
  %1507 = vmatmul.f32.gmra.mxu0 %v1486
  %v1508 = vpop.f32.mrf.mxu0
  %v1509 = vadd.f32 %v1481, %v1508
  %1510 = vdwg.mxu0
  %v1511 = vadd.f32 %v1240, %v1506
  %v1512 = vadd.f32 %v1511, %v1509
  %v1513 = vmax.f32 %v1512, 0.0
  %1514 = vst [vmem:[%s3] sm:$0xff] %v1513
  // Predicated region
  $region14: #{_net_forward_packed.1} parent=0 // pred_check
    _
  $region15: #{_net_forward_packed.1} parent=0 // pred_check_branch
    %1516 = sbr.rel (0) target = $region17
  $region16: #{_net_forward_packed.1} parent=0 // pred_region
    _
  $region17: #{_net_forward_packed.1} parent=0 // pred_fallthru
    _
  // Predicated region
  $region18: #{_net_forward_packed.1} parent=0 // pred_check
    _
  $region19: #{_net_forward_packed.1} parent=0 // pred_check_branch
    %1518 = sbr.rel (0) target = $region21
  $region20: #{_net_forward_packed.1} parent=0 // pred_region
    _
  $region21: #{_net_forward_packed.1} parent=0 // pred_fallthru
    _

</llo_original>
